<compile_context>
chip_gen: v7x
topology: tpu7x:2x2x1
jax: 0.10.0
libtpu: 0.0.40
codegen_flags: <defaults>
</compile_context>

<pallas_src>
import jax
import jax.numpy as jnp
from jax.experimental import pallas as pl
from jax.experimental.pallas import tpu as pltpu


def _round_up(x, m):
    return (x + m - 1) // m * m


# ---------------------------------------------------------------------------
# Fused kernel: per batch element
#   x_ref    : (H+2, W+2, C)    bf16   zero-padded NHWC input slab
#   wc_ref   : (9, C, F_pad)    bf16   conv weight, tap-major
#   bc_ref   : (1, F_pad)       f32    conv bias (zero-padded)
#   wcls_ref : (F_pad, NC_pad)  f32    classifier weight (zero-padded)
#   bcls_ref : (1, NC_pad)      f32    classifier bias (zero-padded)
#   o_ref    : (1, NC_pad)      f32    logits for this batch element
# ---------------------------------------------------------------------------
def _make_fused_kernel(H, W, C, F_pad, NC_pad):
    HW = H * W
    inv_hw = 1.0 / float(HW)

    def kernel(x_ref, wc_ref, bc_ref, wcls_ref, bcls_ref, o_ref):
        xv = x_ref[...]                      # (H+2, W+2, C) bf16, VMEM resident
        wc = wc_ref[...]                     # (9, C, F_pad) bf16

        # Conv as 9 accumulating matmuls over shifted views (no im2col blob).
        acc = jnp.zeros((HW, F_pad), jnp.float32)
        for dh in range(3):
            for dw in range(3):
                xs = xv[dh:dh + H, dw:dw + W, :].reshape(HW, C)
                acc = acc + jnp.dot(xs, wc[dh * 3 + dw],
                                    preferred_element_type=jnp.float32)

        feats = jnp.maximum(acc + bc_ref[...], 0.0)              # (HW, F_pad) f32

        # Global average pool folded into the same kernel (constant 1/HW).
        pooled = jnp.sum(feats, axis=0, keepdims=True) * inv_hw  # (1, F_pad)

        # Tiny classifier head: (1, F_pad) x (F_pad, NC_pad).
        logits = jnp.dot(pooled, wcls_ref[...],
                         preferred_element_type=jnp.float32) + bcls_ref[...]
        o_ref[...] = logits

    return kernel


@jax.jit
def total_net_forward(x_nchw, params):
    """TotalNet.forward: returns feature-extractor logits [B, num_classes]."""
    w_conv, b_conv, w_cls, b_cls = params      # (3,3,C,F), (F,), (F,NC), (NC,)
    B, C, H, W = x_nchw.shape
    KH, KW, _, F_ = w_conv.shape
    NC = w_cls.shape[1]
    F_pad = _round_up(F_, 128)
    NC_pad = _round_up(NC, 128)

    # ---- wrapper-side layout plumbing (not hot-path compute) ---------------
    x_nhwc = jnp.transpose(x_nchw, (0, 2, 3, 1))                         # NCHW -> NHWC
    x_p = jnp.pad(x_nhwc, ((0, 0), (1, 1), (1, 1), (0, 0)))              # 'same' halo
    x_p = x_p.astype(jnp.bfloat16)
    wc = jnp.pad(w_conv, ((0, 0), (0, 0), (0, 0), (0, F_pad - F_)))
    wc = wc.reshape(KH * KW, C, F_pad).astype(jnp.bfloat16)
    bc = jnp.pad(b_conv, (0, F_pad - F_)).reshape(1, F_pad).astype(jnp.float32)
    wcls = jnp.pad(w_cls, ((0, F_pad - F_), (0, NC_pad - NC))).astype(jnp.float32)
    bcls = jnp.pad(b_cls, (0, NC_pad - NC)).reshape(1, NC_pad).astype(jnp.float32)

    kernel = _make_fused_kernel(H, W, C, F_pad, NC_pad)

    flops = B * (2 * H * W * (KH * KW * C) * F_ + 3 * H * W * F_) + B * 2 * F_ * NC
    bytes_accessed = (x_p.size * 2 + wc.size * 2 + bc.size * 4
                      + wcls.size * 4 + bcls.size * 4 + B * NC_pad * 4)

    out = pl.pallas_call(
        kernel,
        out_shape=jax.ShapeDtypeStruct((B, 1, NC_pad), jnp.float32),
        grid=(B,),
        in_specs=[
            pl.BlockSpec((None, H + 2, W + 2, C), lambda b: (b, 0, 0, 0)),
            pl.BlockSpec((KH * KW, C, F_pad), lambda b: (0, 0, 0)),
            pl.BlockSpec((1, F_pad), lambda b: (0, 0)),
            pl.BlockSpec((F_pad, NC_pad), lambda b: (0, 0)),
            pl.BlockSpec((1, NC_pad), lambda b: (0, 0)),
        ],
        out_specs=pl.BlockSpec((None, 1, NC_pad), lambda b: (b, 0, 0)),
        compiler_params=pltpu.CompilerParams(
            dimension_semantics=("parallel",),
            vmem_limit_bytes=32 * 1024 * 1024,
        ),
        cost_estimate=pl.CostEstimate(
            flops=flops, transcendentals=0, bytes_accessed=bytes_accessed),
    )(x_p, wc, bc, wcls, bcls)

    return out.reshape(B, NC_pad)[:, :NC]


def reference_forward(x_nchw, params):
    """Pure-JAX f32 reference of the same feature extractor (for self-check)."""
    w_conv, b_conv, w_cls, b_cls = params
    B, C, H, W = x_nchw.shape
    x = jnp.transpose(x_nchw, (0, 2, 3, 1))
    xp = jnp.pad(x, ((0, 0), (1, 1), (1, 1), (0, 0)))
    acc = jnp.zeros((B, H, W, w_conv.shape[-1]), jnp.float32)
    for dh in range(3):
        for dw in range(3):
            acc = acc + jnp.einsum('bhwc,cf->bhwf',
                                   xp[:, dh:dh + H, dw:dw + W, :],
                                   w_conv[dh, dw])
    feats = jnp.maximum(acc + b_conv, 0.0)
    pooled = feats.mean(axis=(1, 2))
    return pooled @ w_cls + b_cls


def init_params(key, in_ch, feat_dim, num_classes):
    k1, k2, k3, k4 = jax.random.split(key, 4)
    w_conv = jax.random.normal(k1, (3, 3, in_ch, feat_dim), jnp.float32) * 0.05
    b_conv = jax.random.normal(k2, (feat_dim,), jnp.float32) * 0.01
    w_cls = jax.random.normal(k3, (feat_dim, num_classes), jnp.float32) * 0.05
    b_cls = jax.random.normal(k4, (num_classes,), jnp.float32) * 0.01
    # classifier_reverse (ReverseCLS) exists in __init__ but is unused in
    # TotalNet.forward, so its params are intentionally not materialized.
    return w_conv, b_conv, w_cls, b_cls


if __name__ == "__main__":
    B, C, H, W = 2, 4, 16, 16
    FEAT_DIM = 32
    NUM_CLASSES = 10

    key = jax.random.PRNGKey(0)
    kx, kp = jax.random.split(key)
    x = jax.random.normal(kx, (B, C, H, W), jnp.float32)   # NCHW like PyTorch
    params = init_params(kp, C, FEAT_DIM, NUM_CLASSES)

    out = jax.block_until_ready(total_net_forward(x, params))
    assert out.shape == (B, NUM_CLASSES)

    ref = jax.block_until_ready(reference_forward(x, params))
    max_err = float(jnp.max(jnp.abs(out - ref)))
    assert max_err < 1e-2, f"mismatch vs reference: {max_err}"

    print("KERNEL_OK")
</pallas_src>

<mosaic_0001>
module attributes {stable_mosaic.version = 11 : i64} {
  func.func @kernel(%arg0: i32, %arg1: memref<1x18x18x4xbf16, #tpu.memory_space<vmem>>, %arg2: memref<9x4x128xbf16, #tpu.memory_space<vmem>>, %arg3: memref<1x128xf32, #tpu.memory_space<vmem>>, %arg4: memref<128x128xf32, #tpu.memory_space<vmem>>, %arg5: memref<1x128xf32, #tpu.memory_space<vmem>>, %arg6: memref<1x1x128xf32, #tpu.memory_space<vmem>>) attributes {dimension_semantics = [#tpu.dimension_semantics<parallel>], iteration_bounds = array<i64: 2>, scalar_prefetch = 0 : i64, scratch_operands = 0 : i64, tpu.core_type = #tpu.core_type<tc>, window_params = [{transform_indices = @transform_0, window_bounds = array<i64: 1, 18, 18, 4>}, {pipeline_mode = #tpu.pipeline_mode<synchronous>, transform_indices = @transform_1, window_bounds = array<i64: 9, 4, 128>}, {pipeline_mode = #tpu.pipeline_mode<synchronous>, transform_indices = @transform_2, window_bounds = array<i64: 1, 128>}, {pipeline_mode = #tpu.pipeline_mode<synchronous>, transform_indices = @transform_3, window_bounds = array<i64: 128, 128>}, {pipeline_mode = #tpu.pipeline_mode<synchronous>, transform_indices = @transform_4, window_bounds = array<i64: 1, 128>}, {transform_indices = @transform_5, window_bounds = array<i64: 1, 1, 128>}]} {
    %c0 = arith.constant 0 : index
    %c0_0 = arith.constant 0 : index
    %c0_1 = arith.constant 0 : index
    %c0_2 = arith.constant 0 : index
    %0 = vector.load %arg1[%c0, %c0_0, %c0_1, %c0_2] : memref<1x18x18x4xbf16, #tpu.memory_space<vmem>>, vector<1x18x18x4xbf16>
    %1 = vector.shape_cast %0 : vector<1x18x18x4xbf16> to vector<18x18x4xbf16>
    %c0_3 = arith.constant 0 : index
    %c0_4 = arith.constant 0 : index
    %c0_5 = arith.constant 0 : index
    %2 = vector.load %arg2[%c0_3, %c0_4, %c0_5] : memref<9x4x128xbf16, #tpu.memory_space<vmem>>, vector<9x4x128xbf16>
    %cst = arith.constant 0.000000e+00 : f32
    %3 = vector.broadcast %cst : f32 to vector<256x128xf32>
    %4 = vector.extract_strided_slice %1 {offsets = [0, 0, 0], sizes = [16, 16, 4], strides = [1, 1, 1]} : vector<18x18x4xbf16> to vector<16x16x4xbf16>
    %5 = vector.shape_cast %4 : vector<16x16x4xbf16> to vector<256x4xbf16>
    %6 = vector.extract_strided_slice %2 {offsets = [0, 0, 0], sizes = [1, 4, 128], strides = [1, 1, 1]} : vector<9x4x128xbf16> to vector<1x4x128xbf16>
    %7 = vector.shape_cast %6 : vector<1x4x128xbf16> to vector<4x128xbf16>
    %cst_6 = arith.constant dense<0.000000e+00> : vector<256x128xf32>
    %8 = tpu.matmul %5, %7, %cst_6 {dimension_numbers = #tpu.dot_dimension_numbers<[1], [0], [0], [1], [0, 0, 1, 1], [], []>} : vector<256x4xbf16>, vector<4x128xbf16>, vector<256x128xf32> -> vector<256x128xf32>
    %9 = arith.addf %3, %8 : vector<256x128xf32>
    %10 = vector.extract_strided_slice %1 {offsets = [0, 1, 0], sizes = [16, 16, 4], strides = [1, 1, 1]} : vector<18x18x4xbf16> to vector<16x16x4xbf16>
    %11 = vector.shape_cast %10 : vector<16x16x4xbf16> to vector<256x4xbf16>
    %12 = vector.extract_strided_slice %2 {offsets = [1, 0, 0], sizes = [1, 4, 128], strides = [1, 1, 1]} : vector<9x4x128xbf16> to vector<1x4x128xbf16>
    %13 = vector.shape_cast %12 : vector<1x4x128xbf16> to vector<4x128xbf16>
    %cst_7 = arith.constant dense<0.000000e+00> : vector<256x128xf32>
    %14 = tpu.matmul %11, %13, %cst_7 {dimension_numbers = #tpu.dot_dimension_numbers<[1], [0], [0], [1], [0, 0, 1, 1], [], []>} : vector<256x4xbf16>, vector<4x128xbf16>, vector<256x128xf32> -> vector<256x128xf32>
    %15 = arith.addf %9, %14 : vector<256x128xf32>
    %16 = vector.extract_strided_slice %1 {offsets = [0, 2, 0], sizes = [16, 16, 4], strides = [1, 1, 1]} : vector<18x18x4xbf16> to vector<16x16x4xbf16>
    %17 = vector.shape_cast %16 : vector<16x16x4xbf16> to vector<256x4xbf16>
    %18 = vector.extract_strided_slice %2 {offsets = [2, 0, 0], sizes = [1, 4, 128], strides = [1, 1, 1]} : vector<9x4x128xbf16> to vector<1x4x128xbf16>
    %19 = vector.shape_cast %18 : vector<1x4x128xbf16> to vector<4x128xbf16>
    %cst_8 = arith.constant dense<0.000000e+00> : vector<256x128xf32>
    %20 = tpu.matmul %17, %19, %cst_8 {dimension_numbers = #tpu.dot_dimension_numbers<[1], [0], [0], [1], [0, 0, 1, 1], [], []>} : vector<256x4xbf16>, vector<4x128xbf16>, vector<256x128xf32> -> vector<256x128xf32>
    %21 = arith.addf %15, %20 : vector<256x128xf32>
    %22 = vector.extract_strided_slice %1 {offsets = [1, 0, 0], sizes = [16, 16, 4], strides = [1, 1, 1]} : vector<18x18x4xbf16> to vector<16x16x4xbf16>
    %23 = vector.shape_cast %22 : vector<16x16x4xbf16> to vector<256x4xbf16>
    %24 = vector.extract_strided_slice %2 {offsets = [3, 0, 0], sizes = [1, 4, 128], strides = [1, 1, 1]} : vector<9x4x128xbf16> to vector<1x4x128xbf16>
    %25 = vector.shape_cast %24 : vector<1x4x128xbf16> to vector<4x128xbf16>
    %cst_9 = arith.constant dense<0.000000e+00> : vector<256x128xf32>
    %26 = tpu.matmul %23, %25, %cst_9 {dimension_numbers = #tpu.dot_dimension_numbers<[1], [0], [0], [1], [0, 0, 1, 1], [], []>} : vector<256x4xbf16>, vector<4x128xbf16>, vector<256x128xf32> -> vector<256x128xf32>
    %27 = arith.addf %21, %26 : vector<256x128xf32>
    %28 = vector.extract_strided_slice %1 {offsets = [1, 1, 0], sizes = [16, 16, 4], strides = [1, 1, 1]} : vector<18x18x4xbf16> to vector<16x16x4xbf16>
    %29 = vector.shape_cast %28 : vector<16x16x4xbf16> to vector<256x4xbf16>
    %30 = vector.extract_strided_slice %2 {offsets = [4, 0, 0], sizes = [1, 4, 128], strides = [1, 1, 1]} : vector<9x4x128xbf16> to vector<1x4x128xbf16>
    %31 = vector.shape_cast %30 : vector<1x4x128xbf16> to vector<4x128xbf16>
    %cst_10 = arith.constant dense<0.000000e+00> : vector<256x128xf32>
    %32 = tpu.matmul %29, %31, %cst_10 {dimension_numbers = #tpu.dot_dimension_numbers<[1], [0], [0], [1], [0, 0, 1, 1], [], []>} : vector<256x4xbf16>, vector<4x128xbf16>, vector<256x128xf32> -> vector<256x128xf32>
    %33 = arith.addf %27, %32 : vector<256x128xf32>
    %34 = vector.extract_strided_slice %1 {offsets = [1, 2, 0], sizes = [16, 16, 4], strides = [1, 1, 1]} : vector<18x18x4xbf16> to vector<16x16x4xbf16>
    %35 = vector.shape_cast %34 : vector<16x16x4xbf16> to vector<256x4xbf16>
    %36 = vector.extract_strided_slice %2 {offsets = [5, 0, 0], sizes = [1, 4, 128], strides = [1, 1, 1]} : vector<9x4x128xbf16> to vector<1x4x128xbf16>
    %37 = vector.shape_cast %36 : vector<1x4x128xbf16> to vector<4x128xbf16>
    %cst_11 = arith.constant dense<0.000000e+00> : vector<256x128xf32>
    %38 = tpu.matmul %35, %37, %cst_11 {dimension_numbers = #tpu.dot_dimension_numbers<[1], [0], [0], [1], [0, 0, 1, 1], [], []>} : vector<256x4xbf16>, vector<4x128xbf16>, vector<256x128xf32> -> vector<256x128xf32>
    %39 = arith.addf %33, %38 : vector<256x128xf32>
    %40 = vector.extract_strided_slice %1 {offsets = [2, 0, 0], sizes = [16, 16, 4], strides = [1, 1, 1]} : vector<18x18x4xbf16> to vector<16x16x4xbf16>
    %41 = vector.shape_cast %40 : vector<16x16x4xbf16> to vector<256x4xbf16>
    %42 = vector.extract_strided_slice %2 {offsets = [6, 0, 0], sizes = [1, 4, 128], strides = [1, 1, 1]} : vector<9x4x128xbf16> to vector<1x4x128xbf16>
    %43 = vector.shape_cast %42 : vector<1x4x128xbf16> to vector<4x128xbf16>
    %cst_12 = arith.constant dense<0.000000e+00> : vector<256x128xf32>
    %44 = tpu.matmul %41, %43, %cst_12 {dimension_numbers = #tpu.dot_dimension_numbers<[1], [0], [0], [1], [0, 0, 1, 1], [], []>} : vector<256x4xbf16>, vector<4x128xbf16>, vector<256x128xf32> -> vector<256x128xf32>
    %45 = arith.addf %39, %44 : vector<256x128xf32>
    %46 = vector.extract_strided_slice %1 {offsets = [2, 1, 0], sizes = [16, 16, 4], strides = [1, 1, 1]} : vector<18x18x4xbf16> to vector<16x16x4xbf16>
    %47 = vector.shape_cast %46 : vector<16x16x4xbf16> to vector<256x4xbf16>
    %48 = vector.extract_strided_slice %2 {offsets = [7, 0, 0], sizes = [1, 4, 128], strides = [1, 1, 1]} : vector<9x4x128xbf16> to vector<1x4x128xbf16>
    %49 = vector.shape_cast %48 : vector<1x4x128xbf16> to vector<4x128xbf16>
    %cst_13 = arith.constant dense<0.000000e+00> : vector<256x128xf32>
    %50 = tpu.matmul %47, %49, %cst_13 {dimension_numbers = #tpu.dot_dimension_numbers<[1], [0], [0], [1], [0, 0, 1, 1], [], []>} : vector<256x4xbf16>, vector<4x128xbf16>, vector<256x128xf32> -> vector<256x128xf32>
    %51 = arith.addf %45, %50 : vector<256x128xf32>
    %52 = vector.extract_strided_slice %1 {offsets = [2, 2, 0], sizes = [16, 16, 4], strides = [1, 1, 1]} : vector<18x18x4xbf16> to vector<16x16x4xbf16>
    %53 = vector.shape_cast %52 : vector<16x16x4xbf16> to vector<256x4xbf16>
    %54 = vector.extract_strided_slice %2 {offsets = [8, 0, 0], sizes = [1, 4, 128], strides = [1, 1, 1]} : vector<9x4x128xbf16> to vector<1x4x128xbf16>
    %55 = vector.shape_cast %54 : vector<1x4x128xbf16> to vector<4x128xbf16>
    %cst_14 = arith.constant dense<0.000000e+00> : vector<256x128xf32>
    %56 = tpu.matmul %53, %55, %cst_14 {dimension_numbers = #tpu.dot_dimension_numbers<[1], [0], [0], [1], [0, 0, 1, 1], [], []>} : vector<256x4xbf16>, vector<4x128xbf16>, vector<256x128xf32> -> vector<256x128xf32>
    %57 = arith.addf %51, %56 : vector<256x128xf32>
    %c0_15 = arith.constant 0 : index
    %c0_16 = arith.constant 0 : index
    %58 = vector.load %arg3[%c0_15, %c0_16] : memref<1x128xf32, #tpu.memory_space<vmem>>, vector<1x128xf32>
    %59 = vector.broadcast %58 : vector<1x128xf32> to vector<256x128xf32>
    %60 = arith.addf %57, %59 : vector<256x128xf32>
    %cst_17 = arith.constant 0.000000e+00 : f32
    %61 = vector.broadcast %cst_17 : f32 to vector<256x128xf32>
    %62 = arith.maximumf %60, %61 : vector<256x128xf32>
    %cst_18 = arith.constant dense<0.000000e+00> : vector<128xf32>
    %63 = vector.multi_reduction <add>, %62, %cst_18 [0] : vector<256x128xf32> to vector<128xf32>
    %64 = vector.shape_cast %63 : vector<128xf32> to vector<1x128xf32>
    %cst_19 = arith.constant 3.906250e-03 : f32
    %65 = vector.broadcast %cst_19 : f32 to vector<1x128xf32>
    %66 = arith.mulf %64, %65 : vector<1x128xf32>
    %c0_20 = arith.constant 0 : index
    %c0_21 = arith.constant 0 : index
    %67 = vector.load %arg4[%c0_20, %c0_21] : memref<128x128xf32, #tpu.memory_space<vmem>>, vector<128x128xf32>
    %cst_22 = arith.constant dense<0.000000e+00> : vector<1x128xf32>
    %68 = tpu.matmul %66, %67, %cst_22 {dimension_numbers = #tpu.dot_dimension_numbers<[1], [0], [0], [1], [0, 0, 1, 1], [], []>} : vector<1x128xf32>, vector<128x128xf32>, vector<1x128xf32> -> vector<1x128xf32>
    %c0_23 = arith.constant 0 : index
    %c0_24 = arith.constant 0 : index
    %69 = vector.load %arg5[%c0_23, %c0_24] : memref<1x128xf32, #tpu.memory_space<vmem>>, vector<1x128xf32>
    %70 = arith.addf %68, %69 : vector<1x128xf32>
    %c0_25 = arith.constant 0 : index
    %c0_26 = arith.constant 0 : index
    %c0_27 = arith.constant 0 : index
    %71 = vector.load %arg6[%c0_25, %c0_26, %c0_27] : memref<1x1x128xf32, #tpu.memory_space<vmem>>, vector<1x1x128xf32>
    %72 = vector.shape_cast %71 : vector<1x1x128xf32> to vector<1x128xf32>
    %73 = vector.shape_cast %70 : vector<1x128xf32> to vector<1x1x128xf32>
    tpu.vector_store %arg6[%c0_25, %c0_26, %c0_27], %73 {strides = array<i32>} : memref<1x1x128xf32, #tpu.memory_space<vmem>>, vector<1x1x128xf32>,
    return
  }
  func.func @transform_0(%arg0: i32) -> (i32, i32, i32, i32) {
    %c0_i32 = arith.constant 0 : i32
    %c0_i32_0 = arith.constant 0 : i32
    %c0_i32_1 = arith.constant 0 : i32
    %c0_i32_2 = arith.constant 0 : i32
    return %arg0, %c0_i32, %c0_i32_0, %c0_i32_1 : i32, i32, i32, i32
  }
  func.func @transform_1(%arg0: i32) -> (i32, i32, i32) {
    %c0_i32 = arith.constant 0 : i32
    %c0_i32_0 = arith.constant 0 : i32
    %c0_i32_1 = arith.constant 0 : i32
    %c0_i32_2 = arith.constant 0 : i32
    return %c0_i32, %c0_i32_0, %c0_i32_1 : i32, i32, i32
  }
  func.func @transform_2(%arg0: i32) -> (i32, i32) {
    %c0_i32 = arith.constant 0 : i32
    %c0_i32_0 = arith.constant 0 : i32
    %c0_i32_1 = arith.constant 0 : i32
    return %c0_i32, %c0_i32_0 : i32, i32
  }
  func.func @transform_3(%arg0: i32) -> (i32, i32) {
    %c0_i32 = arith.constant 0 : i32
    %c0_i32_0 = arith.constant 0 : i32
    %c0_i32_1 = arith.constant 0 : i32
    return %c0_i32, %c0_i32_0 : i32, i32
  }
  func.func @transform_4(%arg0: i32) -> (i32, i32) {
    %c0_i32 = arith.constant 0 : i32
    %c0_i32_0 = arith.constant 0 : i32
    %c0_i32_1 = arith.constant 0 : i32
    return %c0_i32, %c0_i32_0 : i32, i32
  }
  func.func @transform_5(%arg0: i32) -> (i32, i32, i32) {
    %c0_i32 = arith.constant 0 : i32
    %c0_i32_0 = arith.constant 0 : i32
    %c0_i32_1 = arith.constant 0 : i32
    return %arg0, %c0_i32, %c0_i32_0 : i32, i32, i32
  }
}

</mosaic_0001>

<llo_original>
// kernel: total_net_forward.1
$region0: #{total_net_forward.1}
  #allocation0 [shape = 'u32[]', space=smem, size = 0x4, offset = 0x4, fixed_abs, tag = 'smem constant byte address 0x4 - core index']
  #allocation1 [shape = 'u32[144,128]{1,0:T(1,128)}', space=vmem, size = 0x12000, scoped, tag = 'internal scratch']
  %s0 = inlined_call_operand.vmem [shape: bf16[2,18,18,4], index: 0, kind: input, shape index: {}]
  %s1 = inlined_call_operand.vmem [shape: bf16[9,4,128], index: 1, kind: input, shape index: {}]
  %s2 = inlined_call_operand.vmem [shape: f32[1,128], index: 2, kind: input, shape index: {}]
  %s3 = inlined_call_operand.vmem [shape: f32[128,128], index: 3, kind: input, shape index: {}]
  %s4 = inlined_call_operand.vmem [shape: f32[1,128], index: 4, kind: input, shape index: {}]
  %s5 = inlined_call_operand.hbm [shape: f32[2,1,128], index: 5, kind: output, shape index: {}]
  %s6 = sld [smem:[#allocation0]]
  $region53: #{total_net_forward.1} parent=0
    _
  %s8 = ssub.s32 1, %s6
  %s9 = scalar_select 0, %s8, %s6
  $region1: #{total_net_forward.1} parent=0
    #allocation2 [shape = 'u8[1024]{0}', space=vmem, size = 0x400, scoped, tag = 'output window, operand 0']
    #allocation3 [shape = 's32[2]{0}', space=sflag, size = 0x8, scoped, tag = 'scoped memory for total_net_forward.1']
    %10 = vsyncpa [#allocation3], 0
    %s11 = scalar_lea.sflag [#allocation3], 1
    %12 = vsyncpa %s11, 0
    loop: start=0, step=1, limit=4
    $region2: #{total_net_forward.1} parent=1 // loop_pre_header
      _
    $region3: #{total_net_forward.1} parent=1 // loop_header
      %s14 = sphi 0, %s18
      %p15 = scmp.ge.s32.totalorder %s14, 4
      %s24 = sphi 0, %s26
      %s27 = sphi 0, %s24
      %s28 = sphi 0, %s27
      %s44 = sphi 0, %s28
      %s48 = sphi 0, %s48
      %s50 = sphi 0, %s48
      %s51 = sphi 0, %s50
      %s65 = sphi 0, %s51
      %s69 = sphi 0, %s69
      %s71 = sphi 0, %s69
      %s72 = sphi 0, %s71
      %s86 = sphi 0, %s72
      %s90 = sphi 0, %s90
      %s92 = sphi 0, %s90
      %s93 = sphi 0, %s92
      %s107 = sphi 0, %s93
      %s111 = sphi 0, %s111
      %s113 = sphi 0, %s111
      %s114 = sphi 0, %s113
      %s128 = sphi 0, %s114
      %s134 = sphi 0, %s136
      %s137 = sphi 0, %s134
      %s138 = sphi 0, %s137
      %s154 = sphi 0, %s138
    $region4: #{total_net_forward.1} parent=1 // loop_header_branch
      %17 = sbr.rel (%p15) target = $region8
    $region5: #{total_net_forward.1} parent=1 // loop_body
      %s19 = ssub.s32 %s14, 1
      %s20 = ssub.s32 %s14, 2
      %s21 = sadd.s32 %s14, 1
      %s22 = ssub.s32 %s14, %s21
      %p23 = scmp.eq.s32.totalorder %s22, 0
      %s25 = sadd.s32 %s24, 1
      %s26 = scalar_select %p23, %s24, %s25
      %p29 = pneg %p23
      %p30 = scmp.eq.s32.totalorder %s14, 1
      %p31 = por %p29, %p30
      %p32 = scmp.ne.s32.totalorder %s24, %s27
      %p33 = scmp.eq.s32.totalorder %s14, 0
      %p34 = por %p32, %p33
      %p35 = scmp.ne.s32.totalorder %s24, %s27
      %p36 = scmp.eq.s32.totalorder %s19, 1
      %p37 = por %p35, %p36
      %p38 = scmp.ne.s32.totalorder %s27, %s28
      %p39 = scmp.eq.s32.totalorder %s19, 0
      %p40 = por %p38, %p39
      %p41 = scmp.ne.s32.totalorder %s27, %s28
      %p42 = scmp.eq.s32.totalorder %s20, 1
      %p43 = por %p41, %p42
      %p45 = scmp.ne.s32.totalorder %s28, %s44
      %p46 = scmp.eq.s32.totalorder %s20, 0
      %p47 = por %p45, %p46
      %s49 = sadd.s32 %s48, 1
      %p52 = scmp.eq.s32.totalorder %s14, 1
      %p53 = scmp.ne.s32.totalorder %s48, %s50
      %p54 = scmp.eq.s32.totalorder %s14, 0
      %p55 = por %p53, %p54
      %p56 = scmp.ne.s32.totalorder %s48, %s50
      %p57 = scmp.eq.s32.totalorder %s19, 1
      %p58 = por %p56, %p57
      %p59 = scmp.ne.s32.totalorder %s50, %s51
      %p60 = scmp.eq.s32.totalorder %s19, 0
      %p61 = por %p59, %p60
      %p62 = scmp.ne.s32.totalorder %s50, %s51
      %p63 = scmp.eq.s32.totalorder %s20, 1
      %p64 = por %p62, %p63
      %p66 = scmp.ne.s32.totalorder %s51, %s65
      %p67 = scmp.eq.s32.totalorder %s20, 0
      %p68 = por %p66, %p67
      %s70 = sadd.s32 %s69, 1
      %p73 = scmp.eq.s32.totalorder %s14, 1
      %p74 = scmp.ne.s32.totalorder %s69, %s71
      %p75 = scmp.eq.s32.totalorder %s14, 0
      %p76 = por %p74, %p75
      %p77 = scmp.ne.s32.totalorder %s69, %s71
      %p78 = scmp.eq.s32.totalorder %s19, 1
      %p79 = por %p77, %p78
      %p80 = scmp.ne.s32.totalorder %s71, %s72
      %p81 = scmp.eq.s32.totalorder %s19, 0
      %p82 = por %p80, %p81
      %p83 = scmp.ne.s32.totalorder %s71, %s72
      %p84 = scmp.eq.s32.totalorder %s20, 1
      %p85 = por %p83, %p84
      %p87 = scmp.ne.s32.totalorder %s72, %s86
      %p88 = scmp.eq.s32.totalorder %s20, 0
      %p89 = por %p87, %p88
      %s91 = sadd.s32 %s90, 1
      %p94 = scmp.eq.s32.totalorder %s14, 1
      %p95 = scmp.ne.s32.totalorder %s90, %s92
      %p96 = scmp.eq.s32.totalorder %s14, 0
      %p97 = por %p95, %p96
      %p98 = scmp.ne.s32.totalorder %s90, %s92
      %p99 = scmp.eq.s32.totalorder %s19, 1
      %p100 = por %p98, %p99
      %p101 = scmp.ne.s32.totalorder %s92, %s93
      %p102 = scmp.eq.s32.totalorder %s19, 0
      %p103 = por %p101, %p102
      %p104 = scmp.ne.s32.totalorder %s92, %s93
      %p105 = scmp.eq.s32.totalorder %s20, 1
      %p106 = por %p104, %p105
      %p108 = scmp.ne.s32.totalorder %s93, %s107
      %p109 = scmp.eq.s32.totalorder %s20, 0
      %p110 = por %p108, %p109
      %s112 = sadd.s32 %s111, 1
      %p115 = scmp.eq.s32.totalorder %s14, 1
      %p116 = scmp.ne.s32.totalorder %s111, %s113
      %p117 = scmp.eq.s32.totalorder %s14, 0
      %p118 = por %p116, %p117
      %p119 = scmp.ne.s32.totalorder %s111, %s113
      %p120 = scmp.eq.s32.totalorder %s19, 1
      %p121 = por %p119, %p120
      %p122 = scmp.ne.s32.totalorder %s113, %s114
      %p123 = scmp.eq.s32.totalorder %s19, 0
      %p124 = por %p122, %p123
      %p125 = scmp.ne.s32.totalorder %s113, %s114
      %p126 = scmp.eq.s32.totalorder %s20, 1
      %p127 = por %p125, %p126
      %p129 = scmp.ne.s32.totalorder %s114, %s128
      %p130 = scmp.eq.s32.totalorder %s20, 0
      %p131 = por %p129, %p130
      %s132 = ssub.s32 %s14, %s21
      %p133 = scmp.eq.s32.totalorder %s132, 0
      %s135 = sadd.s32 %s134, 1
      %s136 = scalar_select %p133, %s134, %s135
      %p139 = pneg %p133
      %p140 = scmp.eq.s32.totalorder %s14, 1
      %p141 = por %p139, %p140
      %p142 = scmp.ne.s32.totalorder %s134, %s137
      %p143 = scmp.eq.s32.totalorder %s14, 0
      %p144 = por %p142, %p143
      %p145 = scmp.ne.s32.totalorder %s134, %s137
      %p146 = scmp.eq.s32.totalorder %s19, 1
      %p147 = por %p145, %p146
      %p148 = scmp.ne.s32.totalorder %s137, %s138
      %p149 = scmp.eq.s32.totalorder %s19, 0
      %p150 = por %p148, %p149
      %p151 = scmp.ne.s32.totalorder %s137, %s138
      %p152 = scmp.eq.s32.totalorder %s20, 1
      %p153 = por %p151, %p152
      %p155 = scmp.ne.s32.totalorder %s138, %s154
      %p156 = scmp.eq.s32.totalorder %s20, 0
      %p157 = por %p155, %p156
      %p158 = scmp.le.s32.totalorder 1, %s14
      %p159 = scmp.lt.s32.totalorder %s14, 3
      %p160 = pnand %p158, %p159
      %p161 = pneg %p160
      // Predicated region
      $region9: #{total_net_forward.1} parent=5 // pred_check
        _
      $region10: #{total_net_forward.1} parent=5 // pred_check_branch
        %163 = sbr.rel (%p160) target = $region12
      $region11: #{total_net_forward.1} parent=5 // pred_region
        %s164 = ssub.s32 %s14, 1
        // Predicated region
        $region13: #{total_net_forward.1} parent=11 // pred_check
          %p165 = pneg %p61
        $region14: #{total_net_forward.1} parent=11 // pred_check_branch
          %167 = sbr.rel (%p165) target = $region16
        $region15: #{total_net_forward.1} parent=11 // pred_region
          _
        $region16: #{total_net_forward.1} parent=11 // pred_fallthru
          _
        // Predicated region
        $region17: #{total_net_forward.1} parent=11 // pred_check
          %p168 = pneg %p82
        $region18: #{total_net_forward.1} parent=11 // pred_check_branch
          %170 = sbr.rel (%p168) target = $region20
        $region19: #{total_net_forward.1} parent=11 // pred_region
          _
        $region20: #{total_net_forward.1} parent=11 // pred_fallthru
          _
        // Predicated region
        $region21: #{total_net_forward.1} parent=11 // pred_check
          %p171 = pneg %p103
        $region22: #{total_net_forward.1} parent=11 // pred_check_branch
          %173 = sbr.rel (%p171) target = $region24
        $region23: #{total_net_forward.1} parent=11 // pred_region
          _
        $region24: #{total_net_forward.1} parent=11 // pred_fallthru
          _
        // Predicated region
        $region25: #{total_net_forward.1} parent=11 // pred_check
          %p174 = pneg %p124
        $region26: #{total_net_forward.1} parent=11 // pred_check_branch
          %176 = sbr.rel (%p174) target = $region28
        $region27: #{total_net_forward.1} parent=11 // pred_region
          _
        $region28: #{total_net_forward.1} parent=11 // pred_fallthru
          _
      $region12: #{total_net_forward.1} parent=5 // pred_fallthru
        _
      %p177 = scmp.lt.s32.totalorder %s14, 2
      // Predicated region
      $region29: #{total_net_forward.1} parent=5 // pred_check
        %p178 = pneg %p177
      $region30: #{total_net_forward.1} parent=5 // pred_check_branch
        %180 = sbr.rel (%p178) target = $region32
      $region31: #{total_net_forward.1} parent=5 // pred_region
        // Predicated region
        $region33: #{total_net_forward.1} parent=31 // pred_check
          %p181 = pneg %p34
        $region34: #{total_net_forward.1} parent=31 // pred_check_branch
          %183 = sbr.rel (%p181) target = $region36
        $region35: #{total_net_forward.1} parent=31 // pred_region
          %p184 = scmp.lt.s32.totalorder %s14, 1
          %s185 = scalar_select %p184, %s14, 1
          %s186 = smul.addr %s185, 54
          %s187 = smul.addr %s186, 4
          %s188 = scalar_lea.vmem %s0, %s187
        $region36: #{total_net_forward.1} parent=31 // pred_fallthru
          _
      $region32: #{total_net_forward.1} parent=5 // pred_fallthru
        _
      %p189 = scmp.le.s32.totalorder 1, %s14
      %p190 = scmp.lt.s32.totalorder %s14, 3
      %p191 = pnand %p189, %p190
      %p192 = pneg %p191
      // Predicated region
      $region37: #{total_net_forward.1} parent=5 // pred_check
        _
      $region38: #{total_net_forward.1} parent=5 // pred_check_branch
        %194 = sbr.rel (%p191) target = $region40
      $region39: #{total_net_forward.1} parent=5 // pred_region
        %s195 = ssub.s32 %s14, 1
        %p196 = scmp.lt.s32.totalorder %s19, 1
        %s197 = scalar_select %p196, %s19, 1
        %s198 = smul.addr %s197, 54
        %s199 = smul.addr %s198, 4
        %s200 = scalar_lea.vmem %s0, %s199
        %p201 = pneg %p40
        %p202 = pneg %p37
        %p203 = pneg %p61
        %p204 = pneg %p58
        %p205 = pneg %p82
        %p206 = pneg %p79
        %p207 = pneg %p103
        %p208 = pneg %p100
        %p209 = pneg %p124
        %p210 = pneg %p121
        %p211 = pneg %p150
        %p212 = pneg %p147
        %s213 = sand.u32 %s137, 1
        %s214 = scalar_lea.sflag [#allocation3], %s213
        %s215 = sand.u32 %s137, 1
        %s216 = scalar_lea.vmem [#allocation2], %s215
        %p217 = scmp.lt.s32.totalorder %s19, 1
        %s218 = scalar_select %p217, %s19, 1
        %s219 = smul.addr %s218, 54
        %s220 = smul.addr %s219, 4
        %s221 = scalar_lea.vmem %s0, %s220
        %v223 = vld [vmem:[%s221] sm:$0xf]
        %v224 = vld [vmem:[%s221 + $0x4] sm:$0xf]
        %v225 = vld [vmem:[%s221 + $0x8] sm:$0x1]
        %v226 = vld [vmem:[%s221 + $0xc] sm:$0xf]
        %v227 = vld [vmem:[%s221 + $0x10] sm:$0xf]
        %v228 = vld [vmem:[%s221 + $0x14] sm:$0x1]
        %v229 = vld [vmem:[%s221 + $0x18] sm:$0xf]
        %v230 = vld [vmem:[%s221 + $0x1c] sm:$0xf]
        %v231 = vld [vmem:[%s221 + $0x20] sm:$0x1]
        %v232 = vld [vmem:[%s221 + $0x24] sm:$0xf]
        %v233 = vld [vmem:[%s221 + $0x28] sm:$0xf]
        %v234 = vld [vmem:[%s221 + $0x2c] sm:$0x1]
        %v235 = vld [vmem:[%s221 + $0x30] sm:$0xf]
        %v236 = vld [vmem:[%s221 + $0x34] sm:$0xf]
        %v237 = vld [vmem:[%s221 + $0x38] sm:$0x1]
        %v238 = vld [vmem:[%s221 + $0x3c] sm:$0xf]
        %v239 = vld [vmem:[%s221 + $0x40] sm:$0xf]
        %v240 = vld [vmem:[%s221 + $0x44] sm:$0x1]
        %v241 = vld [vmem:[%s221 + $0x48] sm:$0xf]
        %v242 = vld [vmem:[%s221 + $0x4c] sm:$0xf]
        %v243 = vld [vmem:[%s221 + $0x50] sm:$0x1]
        %v244 = vld [vmem:[%s221 + $0x54] sm:$0xf]
        %v245 = vld [vmem:[%s221 + $0x58] sm:$0xf]
        %v246 = vld [vmem:[%s221 + $0x5c] sm:$0x1]
        %v247 = vld [vmem:[%s221 + $0x60] sm:$0xf]
        %v248 = vld [vmem:[%s221 + $0x64] sm:$0xf]
        %v249 = vld [vmem:[%s221 + $0x68] sm:$0x1]
        %v250 = vld [vmem:[%s221 + $0x6c] sm:$0xf]
        %v251 = vld [vmem:[%s221 + $0x70] sm:$0xf]
        %v252 = vld [vmem:[%s221 + $0x74] sm:$0x1]
        %v253 = vld [vmem:[%s221 + $0x78] sm:$0xf]
        %v254 = vld [vmem:[%s221 + $0x7c] sm:$0xf]
        %v255 = vld [vmem:[%s221 + $0x80] sm:$0x1]
        %v256 = vld [vmem:[%s221 + $0x84] sm:$0xf]
        %v257 = vld [vmem:[%s221 + $0x88] sm:$0xf]
        %v258 = vld [vmem:[%s221 + $0x8c] sm:$0x1]
        %v259 = vld [vmem:[%s221 + $0x90] sm:$0xf]
        %v260 = vld [vmem:[%s221 + $0x94] sm:$0xf]
        %v261 = vld [vmem:[%s221 + $0x98] sm:$0x1]
        %v262 = vld [vmem:[%s221 + $0x9c] sm:$0xf]
        %v263 = vld [vmem:[%s221 + $0xa0] sm:$0xf]
        %v264 = vld [vmem:[%s221 + $0xa4] sm:$0x1]
        %v265 = vld [vmem:[%s221 + $0xa8] sm:$0xf]
        %v266 = vld [vmem:[%s221 + $0xac] sm:$0xf]
        %v267 = vld [vmem:[%s221 + $0xb0] sm:$0x1]
        %v268 = vld [vmem:[%s221 + $0xb4] sm:$0xf]
        %v269 = vld [vmem:[%s221 + $0xb8] sm:$0xf]
        %v270 = vld [vmem:[%s221 + $0xbc] sm:$0x1]
        %v271 = vld [vmem:[%s221 + $0xc0] sm:$0xf]
        %v272 = vld [vmem:[%s221 + $0xc4] sm:$0xf]
        %v273 = vld [vmem:[%s221 + $0xc8] sm:$0x1]
        %v274 = vld [vmem:[%s221 + $0xcc] sm:$0xf]
        %v275 = vld [vmem:[%s221 + $0xd0] sm:$0xf]
        %v276 = vld [vmem:[%s221 + $0xd4] sm:$0x1]
        %v277 = vld [vmem:[%s1] sm:$0x3]
        %v278 = vld [vmem:[%s1 + $0x2] sm:$0x3]
        %v279 = vld [vmem:[%s1 + $0x4] sm:$0x3]
        %v280 = vld [vmem:[%s1 + $0x6] sm:$0x3]
        %v281 = vld [vmem:[%s1 + $0x8] sm:$0x3]
        %v282 = vld [vmem:[%s1 + $0xa] sm:$0x3]
        %v283 = vld [vmem:[%s1 + $0xc] sm:$0x3]
        %v284 = vld [vmem:[%s1 + $0xe] sm:$0x3]
        %v285 = vld [vmem:[%s1 + $0x10] sm:$0x3]
        %vm286 = vsmask.f32 3328
        %vm287 = vsmask.f32 7440
        %vm288 = vmor %vm286, %vm287
        %v290 = vshrl.u32 %v223, 16
        %v292 = vrot.slane %v290, 4
        %v293 = vshll.u32 %v223, 16
        %v295 = vrot.slane %v293, 5
        %v296 = vor.u32 %v292, %v295
        %v297 = vrot.slane %v296, 4
        %v299 = vshll.u32 %v224, 16
        %v301 = vrot.slane %v299, 5
        %v302 = vsel %vm288, %v297, %v301
        %v303 = vshrl.u32 %v224, 16
        %v305 = vrot.slane %v303, 4
        %v306 = vor.u32 %v305, %v301
        %v307 = vrot.slane %v306, 4
        %v309 = vshll.u32 %v225, 16
        %v311 = vrot.slane %v309, 5
        %v312 = vsel %vm288, %v307, %v311
        %v314 = vshrl.u32 %v226, 16
        %v316 = vrot.slane %v314, 4
        %v317 = vshll.u32 %v226, 16
        %v319 = vrot.slane %v317, 5
        %v320 = vor.u32 %v316, %v319
        %v321 = vrot.slane %v320, 4
        %v323 = vshll.u32 %v227, 16
        %v325 = vrot.slane %v323, 5
        %v326 = vsel %vm288, %v321, %v325
        %v327 = vshrl.u32 %v227, 16
        %v329 = vrot.slane %v327, 4
        %v330 = vor.u32 %v329, %v325
        %v331 = vrot.slane %v330, 4
        %v333 = vshll.u32 %v228, 16
        %v335 = vrot.slane %v333, 5
        %v336 = vsel %vm288, %v331, %v335
        %v338 = vshrl.u32 %v229, 16
        %v340 = vrot.slane %v338, 4
        %v341 = vshll.u32 %v229, 16
        %v343 = vrot.slane %v341, 5
        %v344 = vor.u32 %v340, %v343
        %v345 = vrot.slane %v344, 4
        %v347 = vshll.u32 %v230, 16
        %v349 = vrot.slane %v347, 5
        %v350 = vsel %vm288, %v345, %v349
        %v351 = vshrl.u32 %v230, 16
        %v353 = vrot.slane %v351, 4
        %v354 = vor.u32 %v353, %v349
        %v355 = vrot.slane %v354, 4
        %v357 = vshll.u32 %v231, 16
        %v359 = vrot.slane %v357, 5
        %v360 = vsel %vm288, %v355, %v359
        %v362 = vshrl.u32 %v232, 16
        %v364 = vrot.slane %v362, 4
        %v365 = vshll.u32 %v232, 16
        %v367 = vrot.slane %v365, 5
        %v368 = vor.u32 %v364, %v367
        %v369 = vrot.slane %v368, 4
        %v371 = vshll.u32 %v233, 16
        %v373 = vrot.slane %v371, 5
        %v374 = vsel %vm288, %v369, %v373
        %v375 = vshrl.u32 %v233, 16
        %v377 = vrot.slane %v375, 4
        %v378 = vor.u32 %v377, %v373
        %v379 = vrot.slane %v378, 4
        %v381 = vshll.u32 %v234, 16
        %v383 = vrot.slane %v381, 5
        %v384 = vsel %vm288, %v379, %v383
        %v386 = vshrl.u32 %v235, 16
        %v388 = vrot.slane %v386, 4
        %v389 = vshll.u32 %v235, 16
        %v391 = vrot.slane %v389, 5
        %v392 = vor.u32 %v388, %v391
        %v393 = vrot.slane %v392, 4
        %v395 = vshll.u32 %v236, 16
        %v397 = vrot.slane %v395, 5
        %v398 = vsel %vm288, %v393, %v397
        %v399 = vshrl.u32 %v236, 16
        %v401 = vrot.slane %v399, 4
        %v402 = vor.u32 %v401, %v397
        %v403 = vrot.slane %v402, 4
        %v405 = vshll.u32 %v237, 16
        %v407 = vrot.slane %v405, 5
        %v408 = vsel %vm288, %v403, %v407
        %v410 = vshrl.u32 %v238, 16
        %v412 = vrot.slane %v410, 4
        %v413 = vshll.u32 %v238, 16
        %v415 = vrot.slane %v413, 5
        %v416 = vor.u32 %v412, %v415
        %v417 = vrot.slane %v416, 4
        %v419 = vshll.u32 %v239, 16
        %v421 = vrot.slane %v419, 5
        %v422 = vsel %vm288, %v417, %v421
        %v423 = vshrl.u32 %v239, 16
        %v425 = vrot.slane %v423, 4
        %v426 = vor.u32 %v425, %v421
        %v427 = vrot.slane %v426, 4
        %v429 = vshll.u32 %v240, 16
        %v431 = vrot.slane %v429, 5
        %v432 = vsel %vm288, %v427, %v431
        %v434 = vshrl.u32 %v241, 16
        %v436 = vrot.slane %v434, 4
        %v437 = vshll.u32 %v241, 16
        %v439 = vrot.slane %v437, 5
        %v440 = vor.u32 %v436, %v439
        %v441 = vrot.slane %v440, 4
        %v443 = vshll.u32 %v242, 16
        %v445 = vrot.slane %v443, 5
        %v446 = vsel %vm288, %v441, %v445
        %v447 = vshrl.u32 %v242, 16
        %v449 = vrot.slane %v447, 4
        %v450 = vor.u32 %v449, %v445
        %v451 = vrot.slane %v450, 4
        %v453 = vshll.u32 %v243, 16
        %v455 = vrot.slane %v453, 5
        %v456 = vsel %vm288, %v451, %v455
        %v458 = vshrl.u32 %v244, 16
        %v460 = vrot.slane %v458, 4
        %v461 = vshll.u32 %v244, 16
        %v463 = vrot.slane %v461, 5
        %v464 = vor.u32 %v460, %v463
        %v465 = vrot.slane %v464, 4
        %v467 = vshll.u32 %v245, 16
        %v469 = vrot.slane %v467, 5
        %v470 = vsel %vm288, %v465, %v469
        %v471 = vshrl.u32 %v245, 16
        %v473 = vrot.slane %v471, 4
        %v474 = vor.u32 %v473, %v469
        %v475 = vrot.slane %v474, 4
        %v477 = vshll.u32 %v246, 16
        %v479 = vrot.slane %v477, 5
        %v480 = vsel %vm288, %v475, %v479
        %v482 = vshrl.u32 %v247, 16
        %v484 = vrot.slane %v482, 4
        %v485 = vshll.u32 %v247, 16
        %v487 = vrot.slane %v485, 5
        %v488 = vor.u32 %v484, %v487
        %v489 = vrot.slane %v488, 4
        %v491 = vshll.u32 %v248, 16
        %v493 = vrot.slane %v491, 5
        %v494 = vsel %vm288, %v489, %v493
        %v495 = vshrl.u32 %v248, 16
        %v497 = vrot.slane %v495, 4
        %v498 = vor.u32 %v497, %v493
        %v499 = vrot.slane %v498, 4
        %v501 = vshll.u32 %v249, 16
        %v503 = vrot.slane %v501, 5
        %v504 = vsel %vm288, %v499, %v503
        %v506 = vshrl.u32 %v250, 16
        %v508 = vrot.slane %v506, 4
        %v509 = vshll.u32 %v250, 16
        %v511 = vrot.slane %v509, 5
        %v512 = vor.u32 %v508, %v511
        %v513 = vrot.slane %v512, 4
        %v515 = vshll.u32 %v251, 16
        %v517 = vrot.slane %v515, 5
        %v518 = vsel %vm288, %v513, %v517
        %v519 = vshrl.u32 %v251, 16
        %v521 = vrot.slane %v519, 4
        %v522 = vor.u32 %v521, %v517
        %v523 = vrot.slane %v522, 4
        %v525 = vshll.u32 %v252, 16
        %v527 = vrot.slane %v525, 5
        %v528 = vsel %vm288, %v523, %v527
        %v530 = vshrl.u32 %v253, 16
        %v532 = vrot.slane %v530, 4
        %v533 = vshll.u32 %v253, 16
        %v535 = vrot.slane %v533, 5
        %v536 = vor.u32 %v532, %v535
        %v537 = vrot.slane %v536, 4
        %v539 = vshll.u32 %v254, 16
        %v541 = vrot.slane %v539, 5
        %v542 = vsel %vm288, %v537, %v541
        %v543 = vshrl.u32 %v254, 16
        %v545 = vrot.slane %v543, 4
        %v546 = vor.u32 %v545, %v541
        %v547 = vrot.slane %v546, 4
        %v549 = vshll.u32 %v255, 16
        %v551 = vrot.slane %v549, 5
        %v552 = vsel %vm288, %v547, %v551
        %v554 = vshrl.u32 %v256, 16
        %v556 = vrot.slane %v554, 4
        %v557 = vshll.u32 %v256, 16
        %v559 = vrot.slane %v557, 5
        %v560 = vor.u32 %v556, %v559
        %v561 = vrot.slane %v560, 4
        %v563 = vshll.u32 %v257, 16
        %v565 = vrot.slane %v563, 5
        %v566 = vsel %vm288, %v561, %v565
        %v567 = vshrl.u32 %v257, 16
        %v569 = vrot.slane %v567, 4
        %v570 = vor.u32 %v569, %v565
        %v571 = vrot.slane %v570, 4
        %v573 = vshll.u32 %v258, 16
        %v575 = vrot.slane %v573, 5
        %v576 = vsel %vm288, %v571, %v575
        %v578 = vshrl.u32 %v259, 16
        %v580 = vrot.slane %v578, 4
        %v581 = vshll.u32 %v259, 16
        %v583 = vrot.slane %v581, 5
        %v584 = vor.u32 %v580, %v583
        %v585 = vrot.slane %v584, 4
        %v587 = vshll.u32 %v260, 16
        %v589 = vrot.slane %v587, 5
        %v590 = vsel %vm288, %v585, %v589
        %v591 = vshrl.u32 %v260, 16
        %v593 = vrot.slane %v591, 4
        %v594 = vor.u32 %v593, %v589
        %v595 = vrot.slane %v594, 4
        %v597 = vshll.u32 %v261, 16
        %v599 = vrot.slane %v597, 5
        %v600 = vsel %vm288, %v595, %v599
        %v602 = vshrl.u32 %v262, 16
        %v604 = vrot.slane %v602, 4
        %v605 = vshll.u32 %v262, 16
        %v607 = vrot.slane %v605, 5
        %v608 = vor.u32 %v604, %v607
        %v609 = vrot.slane %v608, 4
        %v611 = vshll.u32 %v263, 16
        %v613 = vrot.slane %v611, 5
        %v614 = vsel %vm288, %v609, %v613
        %v615 = vshrl.u32 %v263, 16
        %v617 = vrot.slane %v615, 4
        %v618 = vor.u32 %v617, %v613
        %v619 = vrot.slane %v618, 4
        %v621 = vshll.u32 %v264, 16
        %v623 = vrot.slane %v621, 5
        %v624 = vsel %vm288, %v619, %v623
        %v626 = vshrl.u32 %v265, 16
        %v628 = vrot.slane %v626, 4
        %v629 = vshll.u32 %v265, 16
        %v631 = vrot.slane %v629, 5
        %v632 = vor.u32 %v628, %v631
        %v633 = vrot.slane %v632, 4
        %v635 = vshll.u32 %v266, 16
        %v637 = vrot.slane %v635, 5
        %v638 = vsel %vm288, %v633, %v637
        %v639 = vshrl.u32 %v266, 16
        %v641 = vrot.slane %v639, 4
        %v642 = vor.u32 %v641, %v637
        %v643 = vrot.slane %v642, 4
        %v645 = vshll.u32 %v267, 16
        %v647 = vrot.slane %v645, 5
        %v648 = vsel %vm288, %v643, %v647
        %v650 = vshrl.u32 %v268, 16
        %v652 = vrot.slane %v650, 4
        %v653 = vshll.u32 %v268, 16
        %v655 = vrot.slane %v653, 5
        %v656 = vor.u32 %v652, %v655
        %v657 = vrot.slane %v656, 4
        %v659 = vshll.u32 %v269, 16
        %v661 = vrot.slane %v659, 5
        %v662 = vsel %vm288, %v657, %v661
        %v663 = vshrl.u32 %v269, 16
        %v665 = vrot.slane %v663, 4
        %v666 = vor.u32 %v665, %v661
        %v667 = vrot.slane %v666, 4
        %v669 = vshll.u32 %v270, 16
        %v671 = vrot.slane %v669, 5
        %v672 = vsel %vm288, %v667, %v671
        %v673 = vunpack.c.l.b16 %v302
        %v674 = vunpack.c.l.b16 %v312
        %v675 = vunpack.c.l.b16 %v326
        %v676 = vunpack.c.l.b16 %v336
        %v677 = vunpack.c.l.b16 %v350
        %v678 = vunpack.c.l.b16 %v360
        %v679 = vunpack.c.l.b16 %v374
        %v680 = vunpack.c.l.b16 %v384
        %v681 = vunpack.c.l.b16 %v398
        %v682 = vunpack.c.l.b16 %v408
        %v683 = vunpack.c.l.b16 %v422
        %v684 = vunpack.c.l.b16 %v432
        %v685 = vunpack.c.l.b16 %v446
        %v686 = vunpack.c.l.b16 %v456
        %v687 = vunpack.c.l.b16 %v470
        %v688 = vunpack.c.l.b16 %v480
        %v689 = vunpack.c.l.b16 %v494
        %v690 = vunpack.c.l.b16 %v504
        %v691 = vunpack.c.l.b16 %v518
        %v692 = vunpack.c.l.b16 %v528
        %v693 = vunpack.c.l.b16 %v542
        %v694 = vunpack.c.l.b16 %v552
        %v695 = vunpack.c.l.b16 %v566
        %v696 = vunpack.c.l.b16 %v576
        %v697 = vunpack.c.l.b16 %v590
        %v698 = vunpack.c.l.b16 %v600
        %v699 = vunpack.c.l.b16 %v614
        %v700 = vunpack.c.l.b16 %v624
        %v701 = vunpack.c.l.b16 %v638
        %v702 = vunpack.c.l.b16 %v648
        %v703 = vunpack.c.l.b16 %v662
        %v704 = vunpack.c.l.b16 %v672
        %v705 = vpack.c.b16 %v674, %v673
        %v706 = vpack.c.b16 %v676, %v675
        %v707 = vpack.c.b16 %v678, %v677
        %v708 = vpack.c.b16 %v680, %v679
        %v709 = vpack.c.b16 %v682, %v681
        %v710 = vpack.c.b16 %v684, %v683
        %v711 = vpack.c.b16 %v686, %v685
        %v712 = vpack.c.b16 %v688, %v687
        %v713 = vpack.c.b16 %v690, %v689
        %v714 = vpack.c.b16 %v692, %v691
        %v715 = vpack.c.b16 %v694, %v693
        %v716 = vpack.c.b16 %v696, %v695
        %v717 = vpack.c.b16 %v698, %v697
        %v718 = vpack.c.b16 %v700, %v699
        %v719 = vpack.c.b16 %v702, %v701
        %v720 = vpack.c.b16 %v704, %v703
        %vm721 = vcmask 31744
        %v723 = vsel %vm721, %v705, 0
        %v726 = vsel %vm721, %v706, 0
        %v729 = vsel %vm721, %v707, 0
        %v732 = vsel %vm721, %v708, 0
        %v735 = vsel %vm721, %v709, 0
        %v738 = vsel %vm721, %v710, 0
        %v741 = vsel %vm721, %v711, 0
        %v744 = vsel %vm721, %v712, 0
        %v747 = vsel %vm721, %v713, 0
        %v750 = vsel %vm721, %v714, 0
        %v753 = vsel %vm721, %v715, 0
        %v756 = vsel %vm721, %v716, 0
        %v759 = vsel %vm721, %v717, 0
        %v762 = vsel %vm721, %v718, 0
        %v765 = vsel %vm721, %v719, 0
        %v768 = vsel %vm721, %v720, 0
        %vm770 = vcmask 1041408
        %v772 = vsel %vm770, %v278, 0
        %774 = vmatprep.subr.bf16.mxu0 0
        %775 = vmatpush1.bf16.msra.mxu0 %v772
        %776 = vmatprep.subr.bf16.mxu0 0
        %777 = vmatpush1.bf16.msra.mxu0 0
        %778 = vmatprep.subr.bf16.mxu0 0
        %779 = vmatpush1.bf16.msra.mxu0 0
        %780 = vmatprep.subr.bf16.mxu0 0
        %781 = vmatpush1.bf16.msra.mxu0 0
        %782 = vmatprep.subr.bf16.mxu0 0
        %783 = vmatpush1.bf16.msra.mxu0 0
        %784 = vmatprep.subr.bf16.mxu0 0
        %785 = vmatpush1.bf16.msra.mxu0 0
        %786 = vmatprep.subr.bf16.mxu0 0
        %787 = vmatpush1.bf16.msra.mxu0 0
        %788 = vmatprep.subr.bf16.mxu0 0
        %789 = vmatpush1.bf16.msra.mxu0 0
        %790 = vmatprep.subr.bf16.mxu0 0
        %791 = vmatpush1.bf16.msra.mxu0 0
        %792 = vmatprep.subr.bf16.mxu0 0
        %793 = vmatpush1.bf16.msra.mxu0 0
        %794 = vmatprep.subr.bf16.mxu0 0
        %795 = vmatpush1.bf16.msra.mxu0 0
        %796 = vmatprep.subr.bf16.mxu0 0
        %797 = vmatpush1.bf16.msra.mxu0 0
        %798 = vmatprep.subr.bf16.mxu0 0
        %799 = vmatpush1.bf16.msra.mxu0 0
        %800 = vmatprep.subr.bf16.mxu0 0
        %801 = vmatpush1.bf16.msra.mxu0 0
        %802 = vmatprep.subr.bf16.mxu0 0
        %803 = vmatpush1.bf16.msra.mxu0 0
        %804 = vmatprep.subr.bf16.mxu0 0
        %805 = vmatpush1.bf16.msra.mxu0 0
        %806 = vmatprep.mubr.bf16.mxu0 0
        %807 = vmatmul.mubr.bf16.gmra.mrb[0].mxu0 %v723
        %v808 = vpop.f32.mrb[0].mxu0
        %v809 = vadd.f32 0.0, %v808
        %v810 = vpop.f32.mrb[0].mxu0
        %v811 = vpop.f32.mrb[0].mxu0
        %v812 = vadd.f32 0.0, %v811
        %v813 = vpop.f32.mrb[0].mxu0
        %814 = vmatprep.mubr.bf16.mxu0 0
        %815 = vmatmul.mubr.bf16.gmra.mrb[0].mxu0 %v726
        %v816 = vpop.f32.mrb[0].mxu0
        %v817 = vadd.f32 0.0, %v816
        %v818 = vpop.f32.mrb[0].mxu0
        %v819 = vpop.f32.mrb[0].mxu0
        %v820 = vadd.f32 0.0, %v819
        %v821 = vpop.f32.mrb[0].mxu0
        %822 = vmatprep.mubr.bf16.mxu0 0
        %823 = vmatmul.mubr.bf16.gmra.mrb[0].mxu0 %v729
        %v824 = vpop.f32.mrb[0].mxu0
        %v825 = vadd.f32 0.0, %v824
        %v826 = vpop.f32.mrb[0].mxu0
        %v827 = vpop.f32.mrb[0].mxu0
        %v828 = vadd.f32 0.0, %v827
        %v829 = vpop.f32.mrb[0].mxu0
        %830 = vmatprep.mubr.bf16.mxu0 0
        %831 = vmatmul.mubr.bf16.gmra.mrb[0].mxu0 %v732
        %v832 = vpop.f32.mrb[0].mxu0
        %v833 = vadd.f32 0.0, %v832
        %v834 = vpop.f32.mrb[0].mxu0
        %v835 = vpop.f32.mrb[0].mxu0
        %v836 = vadd.f32 0.0, %v835
        %v837 = vpop.f32.mrb[0].mxu0
        %838 = vmatprep.mubr.bf16.mxu0 0
        %839 = vmatmul.mubr.bf16.gmra.mrb[0].mxu0 %v735
        %v840 = vpop.f32.mrb[0].mxu0
        %v841 = vadd.f32 0.0, %v840
        %v842 = vpop.f32.mrb[0].mxu0
        %v843 = vpop.f32.mrb[0].mxu0
        %v844 = vadd.f32 0.0, %v843
        %v845 = vpop.f32.mrb[0].mxu0
        %846 = vmatprep.mubr.bf16.mxu0 0
        %847 = vmatmul.mubr.bf16.gmra.mrb[0].mxu0 %v738
        %v848 = vpop.f32.mrb[0].mxu0
        %v849 = vadd.f32 0.0, %v848
        %v850 = vpop.f32.mrb[0].mxu0
        %v851 = vpop.f32.mrb[0].mxu0
        %v852 = vadd.f32 0.0, %v851
        %v853 = vpop.f32.mrb[0].mxu0
        %854 = vmatprep.mubr.bf16.mxu0 0
        %855 = vmatmul.mubr.bf16.gmra.mrb[0].mxu0 %v741
        %v856 = vpop.f32.mrb[0].mxu0
        %v857 = vadd.f32 0.0, %v856
        %v858 = vpop.f32.mrb[0].mxu0
        %v859 = vpop.f32.mrb[0].mxu0
        %v860 = vadd.f32 0.0, %v859
        %v861 = vpop.f32.mrb[0].mxu0
        %862 = vmatprep.mubr.bf16.mxu0 0
        %863 = vmatmul.mubr.bf16.gmra.mrb[0].mxu0 %v744
        %v864 = vpop.f32.mrb[0].mxu0
        %v865 = vadd.f32 0.0, %v864
        %v866 = vpop.f32.mrb[0].mxu0
        %v867 = vpop.f32.mrb[0].mxu0
        %v868 = vadd.f32 0.0, %v867
        %v869 = vpop.f32.mrb[0].mxu0
        %870 = vmatprep.mubr.bf16.mxu0 0
        %871 = vmatmul.mubr.bf16.gmra.mrb[0].mxu0 %v747
        %v872 = vpop.f32.mrb[0].mxu0
        %v873 = vadd.f32 0.0, %v872
        %v874 = vpop.f32.mrb[0].mxu0
        %v875 = vpop.f32.mrb[0].mxu0
        %v876 = vadd.f32 0.0, %v875
        %v877 = vpop.f32.mrb[0].mxu0
        %878 = vmatprep.mubr.bf16.mxu0 0
        %879 = vmatmul.mubr.bf16.gmra.mrb[0].mxu0 %v750
        %v880 = vpop.f32.mrb[0].mxu0
        %v881 = vadd.f32 0.0, %v880
        %v882 = vpop.f32.mrb[0].mxu0
        %v883 = vpop.f32.mrb[0].mxu0
        %v884 = vadd.f32 0.0, %v883
        %v885 = vpop.f32.mrb[0].mxu0
        %886 = vmatprep.mubr.bf16.mxu0 0
        %887 = vmatmul.mubr.bf16.gmra.mrb[0].mxu0 %v753
        %v888 = vpop.f32.mrb[0].mxu0
        %v889 = vadd.f32 0.0, %v888
        %v890 = vpop.f32.mrb[0].mxu0
        %v891 = vpop.f32.mrb[0].mxu0
        %v892 = vadd.f32 0.0, %v891
        %v893 = vpop.f32.mrb[0].mxu0
        %894 = vmatprep.mubr.bf16.mxu0 0
        %895 = vmatmul.mubr.bf16.gmra.mrb[0].mxu0 %v756
        %v896 = vpop.f32.mrb[0].mxu0
        %v897 = vadd.f32 0.0, %v896
        %v898 = vpop.f32.mrb[0].mxu0
        %v899 = vpop.f32.mrb[0].mxu0
        %v900 = vadd.f32 0.0, %v899
        %v901 = vpop.f32.mrb[0].mxu0
        %902 = vmatprep.mubr.bf16.mxu0 0
        %903 = vmatmul.mubr.bf16.gmra.mrb[0].mxu0 %v759
        %v904 = vpop.f32.mrb[0].mxu0
        %v905 = vadd.f32 0.0, %v904
        %v906 = vpop.f32.mrb[0].mxu0
        %v907 = vpop.f32.mrb[0].mxu0
        %v908 = vadd.f32 0.0, %v907
        %v909 = vpop.f32.mrb[0].mxu0
        %910 = vmatprep.mubr.bf16.mxu0 0
        %911 = vmatmul.mubr.bf16.gmra.mrb[0].mxu0 %v762
        %v912 = vpop.f32.mrb[0].mxu0
        %v913 = vadd.f32 0.0, %v912
        %v914 = vpop.f32.mrb[0].mxu0
        %v915 = vpop.f32.mrb[0].mxu0
        %v916 = vadd.f32 0.0, %v915
        %v917 = vpop.f32.mrb[0].mxu0
        %918 = vmatprep.mubr.bf16.mxu0 0
        %919 = vmatmul.mubr.bf16.gmra.mrb[0].mxu0 %v765
        %v920 = vpop.f32.mrb[0].mxu0
        %v921 = vadd.f32 0.0, %v920
        %v922 = vpop.f32.mrb[0].mxu0
        %v923 = vpop.f32.mrb[0].mxu0
        %v924 = vadd.f32 0.0, %v923
        %v925 = vpop.f32.mrb[0].mxu0
        %926 = vmatprep.mubr.bf16.mxu0 0
        %927 = vmatmul.mubr.bf16.gmra.mrb[0].mxu0 %v768
        %v928 = vpop.f32.mrb[0].mxu0
        %v929 = vadd.f32 0.0, %v928
        %v930 = vpop.f32.mrb[0].mxu0
        %v931 = vpop.f32.mrb[0].mxu0
        %v932 = vadd.f32 0.0, %v931
        %v933 = vpop.f32.mrb[0].mxu0
        %934 = vdwg.mxu0
        %v967 = vunpack.c.l.b16 %v223
        %v968 = vunpack.c.l.b16 %v224
        %v969 = vunpack.c.l.b16 %v226
        %v970 = vunpack.c.l.b16 %v227
        %v971 = vunpack.c.l.b16 %v229
        %v972 = vunpack.c.l.b16 %v230
        %v973 = vunpack.c.l.b16 %v232
        %v974 = vunpack.c.l.b16 %v233
        %v975 = vunpack.c.l.b16 %v235
        %v976 = vunpack.c.l.b16 %v236
        %v977 = vunpack.c.l.b16 %v238
        %v978 = vunpack.c.l.b16 %v239
        %v979 = vunpack.c.l.b16 %v241
        %v980 = vunpack.c.l.b16 %v242
        %v981 = vunpack.c.l.b16 %v244
        %v982 = vunpack.c.l.b16 %v245
        %v983 = vunpack.c.l.b16 %v247
        %v984 = vunpack.c.l.b16 %v248
        %v985 = vunpack.c.l.b16 %v250
        %v986 = vunpack.c.l.b16 %v251
        %v987 = vunpack.c.l.b16 %v253
        %v988 = vunpack.c.l.b16 %v254
        %v989 = vunpack.c.l.b16 %v256
        %v990 = vunpack.c.l.b16 %v257
        %v991 = vunpack.c.l.b16 %v259
        %v992 = vunpack.c.l.b16 %v260
        %v993 = vunpack.c.l.b16 %v262
        %v994 = vunpack.c.l.b16 %v263
        %v995 = vunpack.c.l.b16 %v265
        %v996 = vunpack.c.l.b16 %v266
        %v997 = vunpack.c.l.b16 %v268
        %v998 = vunpack.c.l.b16 %v269
        %v999 = vpack.c.b16 %v968, %v967
        %v1000 = vpack.c.b16 %v970, %v969
        %v1001 = vpack.c.b16 %v972, %v971
        %v1002 = vpack.c.b16 %v974, %v973
        %v1003 = vpack.c.b16 %v976, %v975
        %v1004 = vpack.c.b16 %v978, %v977
        %v1005 = vpack.c.b16 %v980, %v979
        %v1006 = vpack.c.b16 %v982, %v981
        %v1007 = vpack.c.b16 %v984, %v983
        %v1008 = vpack.c.b16 %v986, %v985
        %v1009 = vpack.c.b16 %v988, %v987
        %v1010 = vpack.c.b16 %v990, %v989
        %v1011 = vpack.c.b16 %v992, %v991
        %v1012 = vpack.c.b16 %v994, %v993
        %v1013 = vpack.c.b16 %v996, %v995
        %v1014 = vpack.c.b16 %v998, %v997
        %v1016 = vsel %vm721, %v999, 0
        %v1019 = vsel %vm721, %v1000, 0
        %v1022 = vsel %vm721, %v1001, 0
        %v1025 = vsel %vm721, %v1002, 0
        %v1028 = vsel %vm721, %v1003, 0
        %v1031 = vsel %vm721, %v1004, 0
        %v1034 = vsel %vm721, %v1005, 0
        %v1037 = vsel %vm721, %v1006, 0
        %v1040 = vsel %vm721, %v1007, 0
        %v1043 = vsel %vm721, %v1008, 0
        %v1046 = vsel %vm721, %v1009, 0
        %v1049 = vsel %vm721, %v1010, 0
        %v1052 = vsel %vm721, %v1011, 0
        %v1055 = vsel %vm721, %v1012, 0
        %v1058 = vsel %vm721, %v1013, 0
        %v1061 = vsel %vm721, %v1014, 0
        %v1064 = vsel %vm770, %v277, 0
        %1066 = vmatprep.subr.bf16.mxu0 0
        %1067 = vmatpush1.bf16.msra.mxu0 %v1064
        %1068 = vmatprep.subr.bf16.mxu0 0
        %1069 = vmatpush1.bf16.msra.mxu0 0
        %1070 = vmatprep.subr.bf16.mxu0 0
        %1071 = vmatpush1.bf16.msra.mxu0 0
        %1072 = vmatprep.subr.bf16.mxu0 0
        %1073 = vmatpush1.bf16.msra.mxu0 0
        %1074 = vmatprep.subr.bf16.mxu0 0
        %1075 = vmatpush1.bf16.msra.mxu0 0
        %1076 = vmatprep.subr.bf16.mxu0 0
        %1077 = vmatpush1.bf16.msra.mxu0 0
        %1078 = vmatprep.subr.bf16.mxu0 0
        %1079 = vmatpush1.bf16.msra.mxu0 0
        %1080 = vmatprep.subr.bf16.mxu0 0
        %1081 = vmatpush1.bf16.msra.mxu0 0
        %1082 = vmatprep.subr.bf16.mxu0 0
        %1083 = vmatpush1.bf16.msra.mxu0 0
        %1084 = vmatprep.subr.bf16.mxu0 0
        %1085 = vmatpush1.bf16.msra.mxu0 0
        %1086 = vmatprep.subr.bf16.mxu0 0
        %1087 = vmatpush1.bf16.msra.mxu0 0
        %1088 = vmatprep.subr.bf16.mxu0 0
        %1089 = vmatpush1.bf16.msra.mxu0 0
        %1090 = vmatprep.subr.bf16.mxu0 0
        %1091 = vmatpush1.bf16.msra.mxu0 0
        %1092 = vmatprep.subr.bf16.mxu0 0
        %1093 = vmatpush1.bf16.msra.mxu0 0
        %1094 = vmatprep.subr.bf16.mxu0 0
        %1095 = vmatpush1.bf16.msra.mxu0 0
        %1096 = vmatprep.subr.bf16.mxu0 0
        %1097 = vmatpush1.bf16.msra.mxu0 0
        %1098 = vmatprep.mubr.bf16.mxu0 0
        %1099 = vmatmul.mubr.bf16.gmra.mrb[0].mxu0 %v1016
        %v1100 = vpop.f32.mrb[0].mxu0
        %v1101 = vadd.f32 %v809, %v1100
        %v1102 = vpop.f32.mrb[0].mxu0
        %v1103 = vpop.f32.mrb[0].mxu0
        %v1104 = vadd.f32 %v812, %v1103
        %v1105 = vpop.f32.mrb[0].mxu0
        %1106 = vmatprep.mubr.bf16.mxu0 0
        %1107 = vmatmul.mubr.bf16.gmra.mrb[0].mxu0 %v1019
        %v1108 = vpop.f32.mrb[0].mxu0
        %v1109 = vadd.f32 %v817, %v1108
        %v1110 = vpop.f32.mrb[0].mxu0
        %v1111 = vpop.f32.mrb[0].mxu0
        %v1112 = vadd.f32 %v820, %v1111
        %v1113 = vpop.f32.mrb[0].mxu0
        %1114 = vmatprep.mubr.bf16.mxu0 0
        %1115 = vmatmul.mubr.bf16.gmra.mrb[0].mxu0 %v1022
        %v1116 = vpop.f32.mrb[0].mxu0
        %v1117 = vadd.f32 %v825, %v1116
        %v1118 = vpop.f32.mrb[0].mxu0
        %v1119 = vpop.f32.mrb[0].mxu0
        %v1120 = vadd.f32 %v828, %v1119
        %v1121 = vpop.f32.mrb[0].mxu0
        %1122 = vmatprep.mubr.bf16.mxu0 0
        %1123 = vmatmul.mubr.bf16.gmra.mrb[0].mxu0 %v1025
        %v1124 = vpop.f32.mrb[0].mxu0
        %v1125 = vadd.f32 %v833, %v1124
        %v1126 = vpop.f32.mrb[0].mxu0
        %v1127 = vpop.f32.mrb[0].mxu0
        %v1128 = vadd.f32 %v836, %v1127
        %v1129 = vpop.f32.mrb[0].mxu0
        %1130 = vmatprep.mubr.bf16.mxu0 0
        %1131 = vmatmul.mubr.bf16.gmra.mrb[0].mxu0 %v1028
        %v1132 = vpop.f32.mrb[0].mxu0
        %v1133 = vadd.f32 %v841, %v1132
        %v1134 = vpop.f32.mrb[0].mxu0
        %v1135 = vpop.f32.mrb[0].mxu0
        %v1136 = vadd.f32 %v844, %v1135
        %v1137 = vpop.f32.mrb[0].mxu0
        %1138 = vmatprep.mubr.bf16.mxu0 0
        %1139 = vmatmul.mubr.bf16.gmra.mrb[0].mxu0 %v1031
        %v1140 = vpop.f32.mrb[0].mxu0
        %v1141 = vadd.f32 %v849, %v1140
        %v1142 = vpop.f32.mrb[0].mxu0
        %v1143 = vpop.f32.mrb[0].mxu0
        %v1144 = vadd.f32 %v852, %v1143
        %v1145 = vpop.f32.mrb[0].mxu0
        %1146 = vmatprep.mubr.bf16.mxu0 0
        %1147 = vmatmul.mubr.bf16.gmra.mrb[0].mxu0 %v1034
        %v1148 = vpop.f32.mrb[0].mxu0
        %v1149 = vadd.f32 %v857, %v1148
        %v1150 = vpop.f32.mrb[0].mxu0
        %v1151 = vpop.f32.mrb[0].mxu0
        %v1152 = vadd.f32 %v860, %v1151
        %v1153 = vpop.f32.mrb[0].mxu0
        %1154 = vmatprep.mubr.bf16.mxu0 0
        %1155 = vmatmul.mubr.bf16.gmra.mrb[0].mxu0 %v1037
        %v1156 = vpop.f32.mrb[0].mxu0
        %v1157 = vadd.f32 %v865, %v1156
        %v1158 = vpop.f32.mrb[0].mxu0
        %v1159 = vpop.f32.mrb[0].mxu0
        %v1160 = vadd.f32 %v868, %v1159
        %v1161 = vpop.f32.mrb[0].mxu0
        %1162 = vmatprep.mubr.bf16.mxu0 0
        %1163 = vmatmul.mubr.bf16.gmra.mrb[0].mxu0 %v1040
        %v1164 = vpop.f32.mrb[0].mxu0
        %v1165 = vadd.f32 %v873, %v1164
        %v1166 = vpop.f32.mrb[0].mxu0
        %v1167 = vpop.f32.mrb[0].mxu0
        %v1168 = vadd.f32 %v876, %v1167
        %v1169 = vpop.f32.mrb[0].mxu0
        %1170 = vmatprep.mubr.bf16.mxu0 0
        %1171 = vmatmul.mubr.bf16.gmra.mrb[0].mxu0 %v1043
        %v1172 = vpop.f32.mrb[0].mxu0
        %v1173 = vadd.f32 %v881, %v1172
        %v1174 = vpop.f32.mrb[0].mxu0
        %v1175 = vpop.f32.mrb[0].mxu0
        %v1176 = vadd.f32 %v884, %v1175
        %v1177 = vpop.f32.mrb[0].mxu0
        %1178 = vmatprep.mubr.bf16.mxu0 0
        %1179 = vmatmul.mubr.bf16.gmra.mrb[0].mxu0 %v1046
        %v1180 = vpop.f32.mrb[0].mxu0
        %v1181 = vadd.f32 %v889, %v1180
        %v1182 = vpop.f32.mrb[0].mxu0
        %v1183 = vpop.f32.mrb[0].mxu0
        %v1184 = vadd.f32 %v892, %v1183
        %v1185 = vpop.f32.mrb[0].mxu0
        %1186 = vmatprep.mubr.bf16.mxu0 0
        %1187 = vmatmul.mubr.bf16.gmra.mrb[0].mxu0 %v1049
        %v1188 = vpop.f32.mrb[0].mxu0
        %v1189 = vadd.f32 %v897, %v1188
        %v1190 = vpop.f32.mrb[0].mxu0
        %v1191 = vpop.f32.mrb[0].mxu0
        %v1192 = vadd.f32 %v900, %v1191
        %v1193 = vpop.f32.mrb[0].mxu0
        %1194 = vmatprep.mubr.bf16.mxu0 0
        %1195 = vmatmul.mubr.bf16.gmra.mrb[0].mxu0 %v1052
        %v1196 = vpop.f32.mrb[0].mxu0
        %v1197 = vadd.f32 %v905, %v1196
        %v1198 = vpop.f32.mrb[0].mxu0
        %v1199 = vpop.f32.mrb[0].mxu0
        %v1200 = vadd.f32 %v908, %v1199
        %v1201 = vpop.f32.mrb[0].mxu0
        %1202 = vmatprep.mubr.bf16.mxu0 0
        %1203 = vmatmul.mubr.bf16.gmra.mrb[0].mxu0 %v1055
        %v1204 = vpop.f32.mrb[0].mxu0
        %v1205 = vadd.f32 %v913, %v1204
        %v1206 = vpop.f32.mrb[0].mxu0
        %v1207 = vpop.f32.mrb[0].mxu0
        %v1208 = vadd.f32 %v916, %v1207
        %v1209 = vpop.f32.mrb[0].mxu0
        %1210 = vmatprep.mubr.bf16.mxu0 0
        %1211 = vmatmul.mubr.bf16.gmra.mrb[0].mxu0 %v1058
        %v1212 = vpop.f32.mrb[0].mxu0
        %v1213 = vadd.f32 %v921, %v1212
        %v1214 = vpop.f32.mrb[0].mxu0
        %v1215 = vpop.f32.mrb[0].mxu0
        %v1216 = vadd.f32 %v924, %v1215
        %v1217 = vpop.f32.mrb[0].mxu0
        %1218 = vmatprep.mubr.bf16.mxu0 0
        %1219 = vmatmul.mubr.bf16.gmra.mrb[0].mxu0 %v1061
        %v1220 = vpop.f32.mrb[0].mxu0
        %v1221 = vadd.f32 %v929, %v1220
        %v1222 = vpop.f32.mrb[0].mxu0
        %v1223 = vpop.f32.mrb[0].mxu0
        %v1224 = vadd.f32 %v932, %v1223
        %v1225 = vpop.f32.mrb[0].mxu0
        %1226 = vdwg.mxu0
        %vm1243 = vcmask 1042432
        %vm1244 = vcmask 1046532
        %vm1245 = vmor %vm1243, %vm1244
        %v1246 = vrot.slane %v223, 5
        %v1247 = vrot.slane %v1246, 4
        %v1248 = vrot.slane %v224, 5
        %v1249 = vsel %vm1245, %v1247, %v1248
        %v1250 = vrot.slane %v1248, 4
        %v1251 = vrot.slane %v225, 5
        %v1252 = vsel %vm1245, %v1250, %v1251
        %v1253 = vrot.slane %v226, 5
        %v1254 = vrot.slane %v1253, 4
        %v1255 = vrot.slane %v227, 5
        %v1256 = vsel %vm1245, %v1254, %v1255
        %v1257 = vrot.slane %v1255, 4
        %v1258 = vrot.slane %v228, 5
        %v1259 = vsel %vm1245, %v1257, %v1258
        %v1260 = vrot.slane %v229, 5
        %v1261 = vrot.slane %v1260, 4
        %v1262 = vrot.slane %v230, 5
        %v1263 = vsel %vm1245, %v1261, %v1262
        %v1264 = vrot.slane %v1262, 4
        %v1265 = vrot.slane %v231, 5
        %v1266 = vsel %vm1245, %v1264, %v1265
        %v1267 = vrot.slane %v232, 5
        %v1268 = vrot.slane %v1267, 4
        %v1269 = vrot.slane %v233, 5
        %v1270 = vsel %vm1245, %v1268, %v1269
        %v1271 = vrot.slane %v1269, 4
        %v1272 = vrot.slane %v234, 5
        %v1273 = vsel %vm1245, %v1271, %v1272
        %v1274 = vrot.slane %v235, 5
        %v1275 = vrot.slane %v1274, 4
        %v1276 = vrot.slane %v236, 5
        %v1277 = vsel %vm1245, %v1275, %v1276
        %v1278 = vrot.slane %v1276, 4
        %v1279 = vrot.slane %v237, 5
        %v1280 = vsel %vm1245, %v1278, %v1279
        %v1281 = vrot.slane %v238, 5
        %v1282 = vrot.slane %v1281, 4
        %v1283 = vrot.slane %v239, 5
        %v1284 = vsel %vm1245, %v1282, %v1283
        %v1285 = vrot.slane %v1283, 4
        %v1286 = vrot.slane %v240, 5
        %v1287 = vsel %vm1245, %v1285, %v1286
        %v1288 = vrot.slane %v241, 5
        %v1289 = vrot.slane %v1288, 4
        %v1290 = vrot.slane %v242, 5
        %v1291 = vsel %vm1245, %v1289, %v1290
        %v1292 = vrot.slane %v1290, 4
        %v1293 = vrot.slane %v243, 5
        %v1294 = vsel %vm1245, %v1292, %v1293
        %v1295 = vrot.slane %v244, 5
        %v1296 = vrot.slane %v1295, 4
        %v1297 = vrot.slane %v245, 5
        %v1298 = vsel %vm1245, %v1296, %v1297
        %v1299 = vrot.slane %v1297, 4
        %v1300 = vrot.slane %v246, 5
        %v1301 = vsel %vm1245, %v1299, %v1300
        %v1302 = vrot.slane %v247, 5
        %v1303 = vrot.slane %v1302, 4
        %v1304 = vrot.slane %v248, 5
        %v1305 = vsel %vm1245, %v1303, %v1304
        %v1306 = vrot.slane %v1304, 4
        %v1307 = vrot.slane %v249, 5
        %v1308 = vsel %vm1245, %v1306, %v1307
        %v1309 = vrot.slane %v250, 5
        %v1310 = vrot.slane %v1309, 4
        %v1311 = vrot.slane %v251, 5
        %v1312 = vsel %vm1245, %v1310, %v1311
        %v1313 = vrot.slane %v1311, 4
        %v1314 = vrot.slane %v252, 5
        %v1315 = vsel %vm1245, %v1313, %v1314
        %v1316 = vrot.slane %v253, 5
        %v1317 = vrot.slane %v1316, 4
        %v1318 = vrot.slane %v254, 5
        %v1319 = vsel %vm1245, %v1317, %v1318
        %v1320 = vrot.slane %v1318, 4
        %v1321 = vrot.slane %v255, 5
        %v1322 = vsel %vm1245, %v1320, %v1321
        %v1323 = vrot.slane %v256, 5
        %v1324 = vrot.slane %v1323, 4
        %v1325 = vrot.slane %v257, 5
        %v1326 = vsel %vm1245, %v1324, %v1325
        %v1327 = vrot.slane %v1325, 4
        %v1328 = vrot.slane %v258, 5
        %v1329 = vsel %vm1245, %v1327, %v1328
        %v1330 = vrot.slane %v259, 5
        %v1331 = vrot.slane %v1330, 4
        %v1332 = vrot.slane %v260, 5
        %v1333 = vsel %vm1245, %v1331, %v1332
        %v1334 = vrot.slane %v1332, 4
        %v1335 = vrot.slane %v261, 5
        %v1336 = vsel %vm1245, %v1334, %v1335
        %v1337 = vrot.slane %v262, 5
        %v1338 = vrot.slane %v1337, 4
        %v1339 = vrot.slane %v263, 5
        %v1340 = vsel %vm1245, %v1338, %v1339
        %v1341 = vrot.slane %v1339, 4
        %v1342 = vrot.slane %v264, 5
        %v1343 = vsel %vm1245, %v1341, %v1342
        %v1344 = vrot.slane %v265, 5
        %v1345 = vrot.slane %v1344, 4
        %v1346 = vrot.slane %v266, 5
        %v1347 = vsel %vm1245, %v1345, %v1346
        %v1348 = vrot.slane %v1346, 4
        %v1349 = vrot.slane %v267, 5
        %v1350 = vsel %vm1245, %v1348, %v1349
        %v1351 = vrot.slane %v268, 5
        %v1352 = vrot.slane %v1351, 4
        %v1353 = vrot.slane %v269, 5
        %v1354 = vsel %vm1245, %v1352, %v1353
        %v1355 = vrot.slane %v1353, 4
        %v1356 = vrot.slane %v270, 5
        %v1357 = vsel %vm1245, %v1355, %v1356
        %v1358 = vunpack.c.l.b16 %v1249
        %v1359 = vunpack.c.l.b16 %v1252
        %v1360 = vunpack.c.l.b16 %v1256
        %v1361 = vunpack.c.l.b16 %v1259
        %v1362 = vunpack.c.l.b16 %v1263
        %v1363 = vunpack.c.l.b16 %v1266
        %v1364 = vunpack.c.l.b16 %v1270
        %v1365 = vunpack.c.l.b16 %v1273
        %v1366 = vunpack.c.l.b16 %v1277
        %v1367 = vunpack.c.l.b16 %v1280
        %v1368 = vunpack.c.l.b16 %v1284
        %v1369 = vunpack.c.l.b16 %v1287
        %v1370 = vunpack.c.l.b16 %v1291
        %v1371 = vunpack.c.l.b16 %v1294
        %v1372 = vunpack.c.l.b16 %v1298
        %v1373 = vunpack.c.l.b16 %v1301
        %v1374 = vunpack.c.l.b16 %v1305
        %v1375 = vunpack.c.l.b16 %v1308
        %v1376 = vunpack.c.l.b16 %v1312
        %v1377 = vunpack.c.l.b16 %v1315
        %v1378 = vunpack.c.l.b16 %v1319
        %v1379 = vunpack.c.l.b16 %v1322
        %v1380 = vunpack.c.l.b16 %v1326
        %v1381 = vunpack.c.l.b16 %v1329
        %v1382 = vunpack.c.l.b16 %v1333
        %v1383 = vunpack.c.l.b16 %v1336
        %v1384 = vunpack.c.l.b16 %v1340
        %v1385 = vunpack.c.l.b16 %v1343
        %v1386 = vunpack.c.l.b16 %v1347
        %v1387 = vunpack.c.l.b16 %v1350
        %v1388 = vunpack.c.l.b16 %v1354
        %v1389 = vunpack.c.l.b16 %v1357
        %v1390 = vpack.c.b16 %v1359, %v1358
        %v1391 = vpack.c.b16 %v1361, %v1360
        %v1392 = vpack.c.b16 %v1363, %v1362
        %v1393 = vpack.c.b16 %v1365, %v1364
        %v1394 = vpack.c.b16 %v1367, %v1366
        %v1395 = vpack.c.b16 %v1369, %v1368
        %v1396 = vpack.c.b16 %v1371, %v1370
        %v1397 = vpack.c.b16 %v1373, %v1372
        %v1398 = vpack.c.b16 %v1375, %v1374
        %v1399 = vpack.c.b16 %v1377, %v1376
        %v1400 = vpack.c.b16 %v1379, %v1378
        %v1401 = vpack.c.b16 %v1381, %v1380
        %v1402 = vpack.c.b16 %v1383, %v1382
        %v1403 = vpack.c.b16 %v1385, %v1384
        %v1404 = vpack.c.b16 %v1387, %v1386
        %v1405 = vpack.c.b16 %v1389, %v1388
        %v1407 = vsel %vm721, %v1390, 0
        %v1410 = vsel %vm721, %v1391, 0
        %v1413 = vsel %vm721, %v1392, 0
        %v1416 = vsel %vm721, %v1393, 0
        %v1419 = vsel %vm721, %v1394, 0
        %v1422 = vsel %vm721, %v1395, 0
        %v1425 = vsel %vm721, %v1396, 0
        %v1428 = vsel %vm721, %v1397, 0
        %v1431 = vsel %vm721, %v1398, 0
        %v1434 = vsel %vm721, %v1399, 0
        %v1437 = vsel %vm721, %v1400, 0
        %v1440 = vsel %vm721, %v1401, 0
        %v1443 = vsel %vm721, %v1402, 0
        %v1446 = vsel %vm721, %v1403, 0
        %v1449 = vsel %vm721, %v1404, 0
        %v1452 = vsel %vm721, %v1405, 0
        %v1455 = vsel %vm770, %v279, 0
        %1457 = vmatprep.subr.bf16.mxu0 0
        %1458 = vmatpush1.bf16.msra.mxu0 %v1455
        %1459 = vmatprep.subr.bf16.mxu0 0
        %1460 = vmatpush1.bf16.msra.mxu0 0
        %1461 = vmatprep.subr.bf16.mxu0 0
        %1462 = vmatpush1.bf16.msra.mxu0 0
        %1463 = vmatprep.subr.bf16.mxu0 0
        %1464 = vmatpush1.bf16.msra.mxu0 0
        %1465 = vmatprep.subr.bf16.mxu0 0
        %1466 = vmatpush1.bf16.msra.mxu0 0
        %1467 = vmatprep.subr.bf16.mxu0 0
        %1468 = vmatpush1.bf16.msra.mxu0 0
        %1469 = vmatprep.subr.bf16.mxu0 0
        %1470 = vmatpush1.bf16.msra.mxu0 0
        %1471 = vmatprep.subr.bf16.mxu0 0
        %1472 = vmatpush1.bf16.msra.mxu0 0
        %1473 = vmatprep.subr.bf16.mxu0 0
        %1474 = vmatpush1.bf16.msra.mxu0 0
        %1475 = vmatprep.subr.bf16.mxu0 0
        %1476 = vmatpush1.bf16.msra.mxu0 0
        %1477 = vmatprep.subr.bf16.mxu0 0
        %1478 = vmatpush1.bf16.msra.mxu0 0
        %1479 = vmatprep.subr.bf16.mxu0 0
        %1480 = vmatpush1.bf16.msra.mxu0 0
        %1481 = vmatprep.subr.bf16.mxu0 0
        %1482 = vmatpush1.bf16.msra.mxu0 0
        %1483 = vmatprep.subr.bf16.mxu0 0
        %1484 = vmatpush1.bf16.msra.mxu0 0
        %1485 = vmatprep.subr.bf16.mxu0 0
        %1486 = vmatpush1.bf16.msra.mxu0 0
        %1487 = vmatprep.subr.bf16.mxu0 0
        %1488 = vmatpush1.bf16.msra.mxu0 0
        %1489 = vmatprep.mubr.bf16.mxu0 0
        %1490 = vmatmul.mubr.bf16.gmra.mrb[0].mxu0 %v1407
        %v1491 = vpop.f32.mrb[0].mxu0
        %v1492 = vadd.f32 0.0, %v1491
        %v1493 = vpop.f32.mrb[0].mxu0
        %v1494 = vpop.f32.mrb[0].mxu0
        %v1495 = vadd.f32 0.0, %v1494
        %v1496 = vpop.f32.mrb[0].mxu0
        %1497 = vmatprep.mubr.bf16.mxu0 0
        %1498 = vmatmul.mubr.bf16.gmra.mrb[0].mxu0 %v1410
        %v1499 = vpop.f32.mrb[0].mxu0
        %v1500 = vadd.f32 0.0, %v1499
        %v1501 = vpop.f32.mrb[0].mxu0
        %v1502 = vpop.f32.mrb[0].mxu0
        %v1503 = vadd.f32 0.0, %v1502
        %v1504 = vpop.f32.mrb[0].mxu0
        %1505 = vmatprep.mubr.bf16.mxu0 0
        %1506 = vmatmul.mubr.bf16.gmra.mrb[0].mxu0 %v1413
        %v1507 = vpop.f32.mrb[0].mxu0
        %v1508 = vadd.f32 0.0, %v1507
        %v1509 = vpop.f32.mrb[0].mxu0
        %v1510 = vpop.f32.mrb[0].mxu0
        %v1511 = vadd.f32 0.0, %v1510
        %v1512 = vpop.f32.mrb[0].mxu0
        %1513 = vmatprep.mubr.bf16.mxu0 0
        %1514 = vmatmul.mubr.bf16.gmra.mrb[0].mxu0 %v1416
        %v1515 = vpop.f32.mrb[0].mxu0
        %v1516 = vadd.f32 0.0, %v1515
        %v1517 = vpop.f32.mrb[0].mxu0
        %v1518 = vpop.f32.mrb[0].mxu0
        %v1519 = vadd.f32 0.0, %v1518
        %v1520 = vpop.f32.mrb[0].mxu0
        %1521 = vmatprep.mubr.bf16.mxu0 0
        %1522 = vmatmul.mubr.bf16.gmra.mrb[0].mxu0 %v1419
        %v1523 = vpop.f32.mrb[0].mxu0
        %v1524 = vadd.f32 0.0, %v1523
        %v1525 = vpop.f32.mrb[0].mxu0
        %v1526 = vpop.f32.mrb[0].mxu0
        %v1527 = vadd.f32 0.0, %v1526
        %v1528 = vpop.f32.mrb[0].mxu0
        %1529 = vmatprep.mubr.bf16.mxu0 0
        %1530 = vmatmul.mubr.bf16.gmra.mrb[0].mxu0 %v1422
        %v1531 = vpop.f32.mrb[0].mxu0
        %v1532 = vadd.f32 0.0, %v1531
        %v1533 = vpop.f32.mrb[0].mxu0
        %v1534 = vpop.f32.mrb[0].mxu0
        %v1535 = vadd.f32 0.0, %v1534
        %v1536 = vpop.f32.mrb[0].mxu0
        %1537 = vmatprep.mubr.bf16.mxu0 0
        %1538 = vmatmul.mubr.bf16.gmra.mrb[0].mxu0 %v1425
        %v1539 = vpop.f32.mrb[0].mxu0
        %v1540 = vadd.f32 0.0, %v1539
        %v1541 = vpop.f32.mrb[0].mxu0
        %v1542 = vpop.f32.mrb[0].mxu0
        %v1543 = vadd.f32 0.0, %v1542
        %v1544 = vpop.f32.mrb[0].mxu0
        %1545 = vmatprep.mubr.bf16.mxu0 0
        %1546 = vmatmul.mubr.bf16.gmra.mrb[0].mxu0 %v1428
        %v1547 = vpop.f32.mrb[0].mxu0
        %v1548 = vadd.f32 0.0, %v1547
        %v1549 = vpop.f32.mrb[0].mxu0
        %v1550 = vpop.f32.mrb[0].mxu0
        %v1551 = vadd.f32 0.0, %v1550
        %v1552 = vpop.f32.mrb[0].mxu0
        %1553 = vmatprep.mubr.bf16.mxu0 0
        %1554 = vmatmul.mubr.bf16.gmra.mrb[0].mxu0 %v1431
        %v1555 = vpop.f32.mrb[0].mxu0
        %v1556 = vadd.f32 0.0, %v1555
        %v1557 = vpop.f32.mrb[0].mxu0
        %v1558 = vpop.f32.mrb[0].mxu0
        %v1559 = vadd.f32 0.0, %v1558
        %v1560 = vpop.f32.mrb[0].mxu0
        %1561 = vmatprep.mubr.bf16.mxu0 0
        %1562 = vmatmul.mubr.bf16.gmra.mrb[0].mxu0 %v1434
        %v1563 = vpop.f32.mrb[0].mxu0
        %v1564 = vadd.f32 0.0, %v1563
        %v1565 = vpop.f32.mrb[0].mxu0
        %v1566 = vpop.f32.mrb[0].mxu0
        %v1567 = vadd.f32 0.0, %v1566
        %v1568 = vpop.f32.mrb[0].mxu0
        %1569 = vmatprep.mubr.bf16.mxu0 0
        %1570 = vmatmul.mubr.bf16.gmra.mrb[0].mxu0 %v1437
        %v1571 = vpop.f32.mrb[0].mxu0
        %v1572 = vadd.f32 0.0, %v1571
        %v1573 = vpop.f32.mrb[0].mxu0
        %v1574 = vpop.f32.mrb[0].mxu0
        %v1575 = vadd.f32 0.0, %v1574
        %v1576 = vpop.f32.mrb[0].mxu0
        %1577 = vmatprep.mubr.bf16.mxu0 0
        %1578 = vmatmul.mubr.bf16.gmra.mrb[0].mxu0 %v1440
        %v1579 = vpop.f32.mrb[0].mxu0
        %v1580 = vadd.f32 0.0, %v1579
        %v1581 = vpop.f32.mrb[0].mxu0
        %v1582 = vpop.f32.mrb[0].mxu0
        %v1583 = vadd.f32 0.0, %v1582
        %v1584 = vpop.f32.mrb[0].mxu0
        %1585 = vmatprep.mubr.bf16.mxu0 0
        %1586 = vmatmul.mubr.bf16.gmra.mrb[0].mxu0 %v1443
        %v1587 = vpop.f32.mrb[0].mxu0
        %v1588 = vadd.f32 0.0, %v1587
        %v1589 = vpop.f32.mrb[0].mxu0
        %v1590 = vpop.f32.mrb[0].mxu0
        %v1591 = vadd.f32 0.0, %v1590
        %v1592 = vpop.f32.mrb[0].mxu0
        %1593 = vmatprep.mubr.bf16.mxu0 0
        %1594 = vmatmul.mubr.bf16.gmra.mrb[0].mxu0 %v1446
        %v1595 = vpop.f32.mrb[0].mxu0
        %v1596 = vadd.f32 0.0, %v1595
        %v1597 = vpop.f32.mrb[0].mxu0
        %v1598 = vpop.f32.mrb[0].mxu0
        %v1599 = vadd.f32 0.0, %v1598
        %v1600 = vpop.f32.mrb[0].mxu0
        %1601 = vmatprep.mubr.bf16.mxu0 0
        %1602 = vmatmul.mubr.bf16.gmra.mrb[0].mxu0 %v1449
        %v1603 = vpop.f32.mrb[0].mxu0
        %v1604 = vadd.f32 0.0, %v1603
        %v1605 = vpop.f32.mrb[0].mxu0
        %v1606 = vpop.f32.mrb[0].mxu0
        %v1607 = vadd.f32 0.0, %v1606
        %v1608 = vpop.f32.mrb[0].mxu0
        %1609 = vmatprep.mubr.bf16.mxu0 0
        %1610 = vmatmul.mubr.bf16.gmra.mrb[0].mxu0 %v1452
        %v1611 = vpop.f32.mrb[0].mxu0
        %v1612 = vadd.f32 0.0, %v1611
        %v1613 = vpop.f32.mrb[0].mxu0
        %v1614 = vpop.f32.mrb[0].mxu0
        %v1615 = vadd.f32 0.0, %v1614
        %v1616 = vpop.f32.mrb[0].mxu0
        %1617 = vdwg.mxu0
        %v1618 = vadd.f32 %v1101, %v1492
        %v1619 = vadd.f32 %v1104, %v1495
        %v1620 = vadd.f32 %v1109, %v1500
        %v1621 = vadd.f32 %v1112, %v1503
        %v1622 = vadd.f32 %v1117, %v1508
        %v1623 = vadd.f32 %v1120, %v1511
        %v1624 = vadd.f32 %v1125, %v1516
        %v1625 = vadd.f32 %v1128, %v1519
        %v1626 = vadd.f32 %v1133, %v1524
        %v1627 = vadd.f32 %v1136, %v1527
        %v1628 = vadd.f32 %v1141, %v1532
        %v1629 = vadd.f32 %v1144, %v1535
        %v1630 = vadd.f32 %v1149, %v1540
        %v1631 = vadd.f32 %v1152, %v1543
        %v1632 = vadd.f32 %v1157, %v1548
        %v1633 = vadd.f32 %v1160, %v1551
        %v1634 = vadd.f32 %v1165, %v1556
        %v1635 = vadd.f32 %v1168, %v1559
        %v1636 = vadd.f32 %v1173, %v1564
        %v1637 = vadd.f32 %v1176, %v1567
        %v1638 = vadd.f32 %v1181, %v1572
        %v1639 = vadd.f32 %v1184, %v1575
        %v1640 = vadd.f32 %v1189, %v1580
        %v1641 = vadd.f32 %v1192, %v1583
        %v1642 = vadd.f32 %v1197, %v1588
        %v1643 = vadd.f32 %v1200, %v1591
        %v1644 = vadd.f32 %v1205, %v1596
        %v1645 = vadd.f32 %v1208, %v1599
        %v1646 = vadd.f32 %v1213, %v1604
        %v1647 = vadd.f32 %v1216, %v1607
        %v1648 = vadd.f32 %v1221, %v1612
        %v1649 = vadd.f32 %v1224, %v1615
        %v1652 = vunpack.c.l.b16 %v271
        %v1653 = vunpack.c.l.b16 %v272
        %v1654 = vpack.c.b16 %v1653, %v1652
        %v1656 = vsel %vm721, %v1654, 0
        %v1659 = vsel %vm770, %v280, 0
        %1661 = vmatprep.subr.bf16.mxu0 0
        %1662 = vmatpush1.bf16.msra.mxu0 %v1659
        %1663 = vmatprep.subr.bf16.mxu0 0
        %1664 = vmatpush1.bf16.msra.mxu0 0
        %1665 = vmatprep.subr.bf16.mxu0 0
        %1666 = vmatpush1.bf16.msra.mxu0 0
        %1667 = vmatprep.subr.bf16.mxu0 0
        %1668 = vmatpush1.bf16.msra.mxu0 0
        %1669 = vmatprep.subr.bf16.mxu0 0
        %1670 = vmatpush1.bf16.msra.mxu0 0
        %1671 = vmatprep.subr.bf16.mxu0 0
        %1672 = vmatpush1.bf16.msra.mxu0 0
        %1673 = vmatprep.subr.bf16.mxu0 0
        %1674 = vmatpush1.bf16.msra.mxu0 0
        %1675 = vmatprep.subr.bf16.mxu0 0
        %1676 = vmatpush1.bf16.msra.mxu0 0
        %1677 = vmatprep.subr.bf16.mxu0 0
        %1678 = vmatpush1.bf16.msra.mxu0 0
        %1679 = vmatprep.subr.bf16.mxu0 0
        %1680 = vmatpush1.bf16.msra.mxu0 0
        %1681 = vmatprep.subr.bf16.mxu0 0
        %1682 = vmatpush1.bf16.msra.mxu0 0
        %1683 = vmatprep.subr.bf16.mxu0 0
        %1684 = vmatpush1.bf16.msra.mxu0 0
        %1685 = vmatprep.subr.bf16.mxu0 0
        %1686 = vmatpush1.bf16.msra.mxu0 0
        %1687 = vmatprep.subr.bf16.mxu0 0
        %1688 = vmatpush1.bf16.msra.mxu0 0
        %1689 = vmatprep.subr.bf16.mxu0 0
        %1690 = vmatpush1.bf16.msra.mxu0 0
        %1691 = vmatprep.subr.bf16.mxu0 0
        %1692 = vmatpush1.bf16.msra.mxu0 0
        %1693 = vmatprep.mubr.bf16.mxu0 0
        %1694 = vmatmul.mubr.bf16.gmra.mrb[0].mxu0 %v1019
        %v1695 = vpop.f32.mrb[0].mxu0
        %v1696 = vadd.f32 0.0, %v1695
        %v1697 = vpop.f32.mrb[0].mxu0
        %v1698 = vpop.f32.mrb[0].mxu0
        %v1699 = vadd.f32 0.0, %v1698
        %v1700 = vpop.f32.mrb[0].mxu0
        %1701 = vmatprep.mubr.bf16.mxu0 0
        %1702 = vmatmul.mubr.bf16.gmra.mrb[0].mxu0 %v1022
        %v1703 = vpop.f32.mrb[0].mxu0
        %v1704 = vadd.f32 0.0, %v1703
        %v1705 = vpop.f32.mrb[0].mxu0
        %v1706 = vpop.f32.mrb[0].mxu0
        %v1707 = vadd.f32 0.0, %v1706
        %v1708 = vpop.f32.mrb[0].mxu0
        %1709 = vmatprep.mubr.bf16.mxu0 0
        %1710 = vmatmul.mubr.bf16.gmra.mrb[0].mxu0 %v1025
        %v1711 = vpop.f32.mrb[0].mxu0
        %v1712 = vadd.f32 0.0, %v1711
        %v1713 = vpop.f32.mrb[0].mxu0
        %v1714 = vpop.f32.mrb[0].mxu0
        %v1715 = vadd.f32 0.0, %v1714
        %v1716 = vpop.f32.mrb[0].mxu0
        %1717 = vmatprep.mubr.bf16.mxu0 0
        %1718 = vmatmul.mubr.bf16.gmra.mrb[0].mxu0 %v1028
        %v1719 = vpop.f32.mrb[0].mxu0
        %v1720 = vadd.f32 0.0, %v1719
        %v1721 = vpop.f32.mrb[0].mxu0
        %v1722 = vpop.f32.mrb[0].mxu0
        %v1723 = vadd.f32 0.0, %v1722
        %v1724 = vpop.f32.mrb[0].mxu0
        %1725 = vmatprep.mubr.bf16.mxu0 0
        %1726 = vmatmul.mubr.bf16.gmra.mrb[0].mxu0 %v1031
        %v1727 = vpop.f32.mrb[0].mxu0
        %v1728 = vadd.f32 0.0, %v1727
        %v1729 = vpop.f32.mrb[0].mxu0
        %v1730 = vpop.f32.mrb[0].mxu0
        %v1731 = vadd.f32 0.0, %v1730
        %v1732 = vpop.f32.mrb[0].mxu0
        %1733 = vmatprep.mubr.bf16.mxu0 0
        %1734 = vmatmul.mubr.bf16.gmra.mrb[0].mxu0 %v1034
        %v1735 = vpop.f32.mrb[0].mxu0
        %v1736 = vadd.f32 0.0, %v1735
        %v1737 = vpop.f32.mrb[0].mxu0
        %v1738 = vpop.f32.mrb[0].mxu0
        %v1739 = vadd.f32 0.0, %v1738
        %v1740 = vpop.f32.mrb[0].mxu0
        %1741 = vmatprep.mubr.bf16.mxu0 0
        %1742 = vmatmul.mubr.bf16.gmra.mrb[0].mxu0 %v1037
        %v1743 = vpop.f32.mrb[0].mxu0
        %v1744 = vadd.f32 0.0, %v1743
        %v1745 = vpop.f32.mrb[0].mxu0
        %v1746 = vpop.f32.mrb[0].mxu0
        %v1747 = vadd.f32 0.0, %v1746
        %v1748 = vpop.f32.mrb[0].mxu0
        %1749 = vmatprep.mubr.bf16.mxu0 0
        %1750 = vmatmul.mubr.bf16.gmra.mrb[0].mxu0 %v1040
        %v1751 = vpop.f32.mrb[0].mxu0
        %v1752 = vadd.f32 0.0, %v1751
        %v1753 = vpop.f32.mrb[0].mxu0
        %v1754 = vpop.f32.mrb[0].mxu0
        %v1755 = vadd.f32 0.0, %v1754
        %v1756 = vpop.f32.mrb[0].mxu0
        %1757 = vmatprep.mubr.bf16.mxu0 0
        %1758 = vmatmul.mubr.bf16.gmra.mrb[0].mxu0 %v1043
        %v1759 = vpop.f32.mrb[0].mxu0
        %v1760 = vadd.f32 0.0, %v1759
        %v1761 = vpop.f32.mrb[0].mxu0
        %v1762 = vpop.f32.mrb[0].mxu0
        %v1763 = vadd.f32 0.0, %v1762
        %v1764 = vpop.f32.mrb[0].mxu0
        %1765 = vmatprep.mubr.bf16.mxu0 0
        %1766 = vmatmul.mubr.bf16.gmra.mrb[0].mxu0 %v1046
        %v1767 = vpop.f32.mrb[0].mxu0
        %v1768 = vadd.f32 0.0, %v1767
        %v1769 = vpop.f32.mrb[0].mxu0
        %v1770 = vpop.f32.mrb[0].mxu0
        %v1771 = vadd.f32 0.0, %v1770
        %v1772 = vpop.f32.mrb[0].mxu0
        %1773 = vmatprep.mubr.bf16.mxu0 0
        %1774 = vmatmul.mubr.bf16.gmra.mrb[0].mxu0 %v1049
        %v1775 = vpop.f32.mrb[0].mxu0
        %v1776 = vadd.f32 0.0, %v1775
        %v1777 = vpop.f32.mrb[0].mxu0
        %v1778 = vpop.f32.mrb[0].mxu0
        %v1779 = vadd.f32 0.0, %v1778
        %v1780 = vpop.f32.mrb[0].mxu0
        %1781 = vmatprep.mubr.bf16.mxu0 0
        %1782 = vmatmul.mubr.bf16.gmra.mrb[0].mxu0 %v1052
        %v1783 = vpop.f32.mrb[0].mxu0
        %v1784 = vadd.f32 0.0, %v1783
        %v1785 = vpop.f32.mrb[0].mxu0
        %v1786 = vpop.f32.mrb[0].mxu0
        %v1787 = vadd.f32 0.0, %v1786
        %v1788 = vpop.f32.mrb[0].mxu0
        %1789 = vmatprep.mubr.bf16.mxu0 0
        %1790 = vmatmul.mubr.bf16.gmra.mrb[0].mxu0 %v1055
        %v1791 = vpop.f32.mrb[0].mxu0
        %v1792 = vadd.f32 0.0, %v1791
        %v1793 = vpop.f32.mrb[0].mxu0
        %v1794 = vpop.f32.mrb[0].mxu0
        %v1795 = vadd.f32 0.0, %v1794
        %v1796 = vpop.f32.mrb[0].mxu0
        %1797 = vmatprep.mubr.bf16.mxu0 0
        %1798 = vmatmul.mubr.bf16.gmra.mrb[0].mxu0 %v1058
        %v1799 = vpop.f32.mrb[0].mxu0
        %v1800 = vadd.f32 0.0, %v1799
        %v1801 = vpop.f32.mrb[0].mxu0
        %v1802 = vpop.f32.mrb[0].mxu0
        %v1803 = vadd.f32 0.0, %v1802
        %v1804 = vpop.f32.mrb[0].mxu0
        %1805 = vmatprep.mubr.bf16.mxu0 0
        %1806 = vmatmul.mubr.bf16.gmra.mrb[0].mxu0 %v1061
        %v1807 = vpop.f32.mrb[0].mxu0
        %v1808 = vadd.f32 0.0, %v1807
        %v1809 = vpop.f32.mrb[0].mxu0
        %v1810 = vpop.f32.mrb[0].mxu0
        %v1811 = vadd.f32 0.0, %v1810
        %v1812 = vpop.f32.mrb[0].mxu0
        %1813 = vmatprep.mubr.bf16.mxu0 0
        %1814 = vmatmul.mubr.bf16.gmra.mrb[0].mxu0 %v1656
        %v1815 = vpop.f32.mrb[0].mxu0
        %v1816 = vadd.f32 0.0, %v1815
        %v1817 = vpop.f32.mrb[0].mxu0
        %v1818 = vpop.f32.mrb[0].mxu0
        %v1819 = vadd.f32 0.0, %v1818
        %v1820 = vpop.f32.mrb[0].mxu0
        %1821 = vdwg.mxu0
        %v1822 = vadd.f32 %v1618, %v1696
        %v1823 = vadd.f32 %v1619, %v1699
        %v1824 = vadd.f32 %v1620, %v1704
        %v1825 = vadd.f32 %v1621, %v1707
        %v1826 = vadd.f32 %v1622, %v1712
        %v1827 = vadd.f32 %v1623, %v1715
        %v1828 = vadd.f32 %v1624, %v1720
        %v1829 = vadd.f32 %v1625, %v1723
        %v1830 = vadd.f32 %v1626, %v1728
        %v1831 = vadd.f32 %v1627, %v1731
        %v1832 = vadd.f32 %v1628, %v1736
        %v1833 = vadd.f32 %v1629, %v1739
        %v1834 = vadd.f32 %v1630, %v1744
        %v1835 = vadd.f32 %v1631, %v1747
        %v1836 = vadd.f32 %v1632, %v1752
        %v1837 = vadd.f32 %v1633, %v1755
        %v1838 = vadd.f32 %v1634, %v1760
        %v1839 = vadd.f32 %v1635, %v1763
        %v1840 = vadd.f32 %v1636, %v1768
        %v1841 = vadd.f32 %v1637, %v1771
        %v1842 = vadd.f32 %v1638, %v1776
        %v1843 = vadd.f32 %v1639, %v1779
        %v1844 = vadd.f32 %v1640, %v1784
        %v1845 = vadd.f32 %v1641, %v1787
        %v1846 = vadd.f32 %v1642, %v1792
        %v1847 = vadd.f32 %v1643, %v1795
        %v1848 = vadd.f32 %v1644, %v1800
        %v1849 = vadd.f32 %v1645, %v1803
        %v1850 = vadd.f32 %v1646, %v1808
        %v1851 = vadd.f32 %v1647, %v1811
        %v1852 = vadd.f32 %v1648, %v1816
        %v1853 = vadd.f32 %v1649, %v1819
        %v1855 = vshrl.u32 %v271, 16
        %v1857 = vrot.slane %v1855, 4
        %v1858 = vshll.u32 %v271, 16
        %v1860 = vrot.slane %v1858, 5
        %v1861 = vor.u32 %v1857, %v1860
        %v1862 = vrot.slane %v1861, 4
        %v1864 = vshll.u32 %v272, 16
        %v1866 = vrot.slane %v1864, 5
        %v1867 = vsel %vm288, %v1862, %v1866
        %v1868 = vshrl.u32 %v272, 16
        %v1870 = vrot.slane %v1868, 4
        %v1871 = vor.u32 %v1870, %v1866
        %v1872 = vrot.slane %v1871, 4
        %v1874 = vshll.u32 %v273, 16
        %v1876 = vrot.slane %v1874, 5
        %v1877 = vsel %vm288, %v1872, %v1876
        %v1878 = vunpack.c.l.b16 %v1867
        %v1879 = vunpack.c.l.b16 %v1877
        %v1880 = vpack.c.b16 %v1879, %v1878
        %v1882 = vsel %vm721, %v1880, 0
        %v1885 = vsel %vm770, %v281, 0
        %1887 = vmatprep.subr.bf16.mxu0 0
        %1888 = vmatpush1.bf16.msra.mxu0 %v1885
        %1889 = vmatprep.subr.bf16.mxu0 0
        %1890 = vmatpush1.bf16.msra.mxu0 0
        %1891 = vmatprep.subr.bf16.mxu0 0
        %1892 = vmatpush1.bf16.msra.mxu0 0
        %1893 = vmatprep.subr.bf16.mxu0 0
        %1894 = vmatpush1.bf16.msra.mxu0 0
        %1895 = vmatprep.subr.bf16.mxu0 0
        %1896 = vmatpush1.bf16.msra.mxu0 0
        %1897 = vmatprep.subr.bf16.mxu0 0
        %1898 = vmatpush1.bf16.msra.mxu0 0
        %1899 = vmatprep.subr.bf16.mxu0 0
        %1900 = vmatpush1.bf16.msra.mxu0 0
        %1901 = vmatprep.subr.bf16.mxu0 0
        %1902 = vmatpush1.bf16.msra.mxu0 0
        %1903 = vmatprep.subr.bf16.mxu0 0
        %1904 = vmatpush1.bf16.msra.mxu0 0
        %1905 = vmatprep.subr.bf16.mxu0 0
        %1906 = vmatpush1.bf16.msra.mxu0 0
        %1907 = vmatprep.subr.bf16.mxu0 0
        %1908 = vmatpush1.bf16.msra.mxu0 0
        %1909 = vmatprep.subr.bf16.mxu0 0
        %1910 = vmatpush1.bf16.msra.mxu0 0
        %1911 = vmatprep.subr.bf16.mxu0 0
        %1912 = vmatpush1.bf16.msra.mxu0 0
        %1913 = vmatprep.subr.bf16.mxu0 0
        %1914 = vmatpush1.bf16.msra.mxu0 0
        %1915 = vmatprep.subr.bf16.mxu0 0
        %1916 = vmatpush1.bf16.msra.mxu0 0
        %1917 = vmatprep.subr.bf16.mxu0 0
        %1918 = vmatpush1.bf16.msra.mxu0 0
        %1919 = vmatprep.mubr.bf16.mxu0 0
        %1920 = vmatmul.mubr.bf16.gmra.mrb[0].mxu0 %v726
        %v1921 = vpop.f32.mrb[0].mxu0
        %v1922 = vadd.f32 0.0, %v1921
        %v1923 = vpop.f32.mrb[0].mxu0
        %v1924 = vpop.f32.mrb[0].mxu0
        %v1925 = vadd.f32 0.0, %v1924
        %v1926 = vpop.f32.mrb[0].mxu0
        %1927 = vmatprep.mubr.bf16.mxu0 0
        %1928 = vmatmul.mubr.bf16.gmra.mrb[0].mxu0 %v729
        %v1929 = vpop.f32.mrb[0].mxu0
        %v1930 = vadd.f32 0.0, %v1929
        %v1931 = vpop.f32.mrb[0].mxu0
        %v1932 = vpop.f32.mrb[0].mxu0
        %v1933 = vadd.f32 0.0, %v1932
        %v1934 = vpop.f32.mrb[0].mxu0
        %1935 = vmatprep.mubr.bf16.mxu0 0
        %1936 = vmatmul.mubr.bf16.gmra.mrb[0].mxu0 %v732
        %v1937 = vpop.f32.mrb[0].mxu0
        %v1938 = vadd.f32 0.0, %v1937
        %v1939 = vpop.f32.mrb[0].mxu0
        %v1940 = vpop.f32.mrb[0].mxu0
        %v1941 = vadd.f32 0.0, %v1940
        %v1942 = vpop.f32.mrb[0].mxu0
        %1943 = vmatprep.mubr.bf16.mxu0 0
        %1944 = vmatmul.mubr.bf16.gmra.mrb[0].mxu0 %v735
        %v1945 = vpop.f32.mrb[0].mxu0
        %v1946 = vadd.f32 0.0, %v1945
        %v1947 = vpop.f32.mrb[0].mxu0
        %v1948 = vpop.f32.mrb[0].mxu0
        %v1949 = vadd.f32 0.0, %v1948
        %v1950 = vpop.f32.mrb[0].mxu0
        %1951 = vmatprep.mubr.bf16.mxu0 0
        %1952 = vmatmul.mubr.bf16.gmra.mrb[0].mxu0 %v738
        %v1953 = vpop.f32.mrb[0].mxu0
        %v1954 = vadd.f32 0.0, %v1953
        %v1955 = vpop.f32.mrb[0].mxu0
        %v1956 = vpop.f32.mrb[0].mxu0
        %v1957 = vadd.f32 0.0, %v1956
        %v1958 = vpop.f32.mrb[0].mxu0
        %1959 = vmatprep.mubr.bf16.mxu0 0
        %1960 = vmatmul.mubr.bf16.gmra.mrb[0].mxu0 %v741
        %v1961 = vpop.f32.mrb[0].mxu0
        %v1962 = vadd.f32 0.0, %v1961
        %v1963 = vpop.f32.mrb[0].mxu0
        %v1964 = vpop.f32.mrb[0].mxu0
        %v1965 = vadd.f32 0.0, %v1964
        %v1966 = vpop.f32.mrb[0].mxu0
        %1967 = vmatprep.mubr.bf16.mxu0 0
        %1968 = vmatmul.mubr.bf16.gmra.mrb[0].mxu0 %v744
        %v1969 = vpop.f32.mrb[0].mxu0
        %v1970 = vadd.f32 0.0, %v1969
        %v1971 = vpop.f32.mrb[0].mxu0
        %v1972 = vpop.f32.mrb[0].mxu0
        %v1973 = vadd.f32 0.0, %v1972
        %v1974 = vpop.f32.mrb[0].mxu0
        %1975 = vmatprep.mubr.bf16.mxu0 0
        %1976 = vmatmul.mubr.bf16.gmra.mrb[0].mxu0 %v747
        %v1977 = vpop.f32.mrb[0].mxu0
        %v1978 = vadd.f32 0.0, %v1977
        %v1979 = vpop.f32.mrb[0].mxu0
        %v1980 = vpop.f32.mrb[0].mxu0
        %v1981 = vadd.f32 0.0, %v1980
        %v1982 = vpop.f32.mrb[0].mxu0
        %1983 = vmatprep.mubr.bf16.mxu0 0
        %1984 = vmatmul.mubr.bf16.gmra.mrb[0].mxu0 %v750
        %v1985 = vpop.f32.mrb[0].mxu0
        %v1986 = vadd.f32 0.0, %v1985
        %v1987 = vpop.f32.mrb[0].mxu0
        %v1988 = vpop.f32.mrb[0].mxu0
        %v1989 = vadd.f32 0.0, %v1988
        %v1990 = vpop.f32.mrb[0].mxu0
        %1991 = vmatprep.mubr.bf16.mxu0 0
        %1992 = vmatmul.mubr.bf16.gmra.mrb[0].mxu0 %v753
        %v1993 = vpop.f32.mrb[0].mxu0
        %v1994 = vadd.f32 0.0, %v1993
        %v1995 = vpop.f32.mrb[0].mxu0
        %v1996 = vpop.f32.mrb[0].mxu0
        %v1997 = vadd.f32 0.0, %v1996
        %v1998 = vpop.f32.mrb[0].mxu0
        %1999 = vmatprep.mubr.bf16.mxu0 0
        %2000 = vmatmul.mubr.bf16.gmra.mrb[0].mxu0 %v756
        %v2001 = vpop.f32.mrb[0].mxu0
        %v2002 = vadd.f32 0.0, %v2001
        %v2003 = vpop.f32.mrb[0].mxu0
        %v2004 = vpop.f32.mrb[0].mxu0
        %v2005 = vadd.f32 0.0, %v2004
        %v2006 = vpop.f32.mrb[0].mxu0
        %2007 = vmatprep.mubr.bf16.mxu0 0
        %2008 = vmatmul.mubr.bf16.gmra.mrb[0].mxu0 %v759
        %v2009 = vpop.f32.mrb[0].mxu0
        %v2010 = vadd.f32 0.0, %v2009
        %v2011 = vpop.f32.mrb[0].mxu0
        %v2012 = vpop.f32.mrb[0].mxu0
        %v2013 = vadd.f32 0.0, %v2012
        %v2014 = vpop.f32.mrb[0].mxu0
        %2015 = vmatprep.mubr.bf16.mxu0 0
        %2016 = vmatmul.mubr.bf16.gmra.mrb[0].mxu0 %v762
        %v2017 = vpop.f32.mrb[0].mxu0
        %v2018 = vadd.f32 0.0, %v2017
        %v2019 = vpop.f32.mrb[0].mxu0
        %v2020 = vpop.f32.mrb[0].mxu0
        %v2021 = vadd.f32 0.0, %v2020
        %v2022 = vpop.f32.mrb[0].mxu0
        %2023 = vmatprep.mubr.bf16.mxu0 0
        %2024 = vmatmul.mubr.bf16.gmra.mrb[0].mxu0 %v765
        %v2025 = vpop.f32.mrb[0].mxu0
        %v2026 = vadd.f32 0.0, %v2025
        %v2027 = vpop.f32.mrb[0].mxu0
        %v2028 = vpop.f32.mrb[0].mxu0
        %v2029 = vadd.f32 0.0, %v2028
        %v2030 = vpop.f32.mrb[0].mxu0
        %2031 = vmatprep.mubr.bf16.mxu0 0
        %2032 = vmatmul.mubr.bf16.gmra.mrb[0].mxu0 %v768
        %v2033 = vpop.f32.mrb[0].mxu0
        %v2034 = vadd.f32 0.0, %v2033
        %v2035 = vpop.f32.mrb[0].mxu0
        %v2036 = vpop.f32.mrb[0].mxu0
        %v2037 = vadd.f32 0.0, %v2036
        %v2038 = vpop.f32.mrb[0].mxu0
        %2039 = vmatprep.mubr.bf16.mxu0 0
        %2040 = vmatmul.mubr.bf16.gmra.mrb[0].mxu0 %v1882
        %v2041 = vpop.f32.mrb[0].mxu0
        %v2042 = vadd.f32 0.0, %v2041
        %v2043 = vpop.f32.mrb[0].mxu0
        %v2044 = vpop.f32.mrb[0].mxu0
        %v2045 = vadd.f32 0.0, %v2044
        %v2046 = vpop.f32.mrb[0].mxu0
        %2047 = vdwg.mxu0
        %v2048 = vadd.f32 %v1822, %v1922
        %v2049 = vadd.f32 %v1823, %v1925
        %v2050 = vadd.f32 %v1824, %v1930
        %v2051 = vadd.f32 %v1825, %v1933
        %v2052 = vadd.f32 %v1826, %v1938
        %v2053 = vadd.f32 %v1827, %v1941
        %v2054 = vadd.f32 %v1828, %v1946
        %v2055 = vadd.f32 %v1829, %v1949
        %v2056 = vadd.f32 %v1830, %v1954
        %v2057 = vadd.f32 %v1831, %v1957
        %v2058 = vadd.f32 %v1832, %v1962
        %v2059 = vadd.f32 %v1833, %v1965
        %v2060 = vadd.f32 %v1834, %v1970
        %v2061 = vadd.f32 %v1835, %v1973
        %v2062 = vadd.f32 %v1836, %v1978
        %v2063 = vadd.f32 %v1837, %v1981
        %v2064 = vadd.f32 %v1838, %v1986
        %v2065 = vadd.f32 %v1839, %v1989
        %v2066 = vadd.f32 %v1840, %v1994
        %v2067 = vadd.f32 %v1841, %v1997
        %v2068 = vadd.f32 %v1842, %v2002
        %v2069 = vadd.f32 %v1843, %v2005
        %v2070 = vadd.f32 %v1844, %v2010
        %v2071 = vadd.f32 %v1845, %v2013
        %v2072 = vadd.f32 %v1846, %v2018
        %v2073 = vadd.f32 %v1847, %v2021
        %v2074 = vadd.f32 %v1848, %v2026
        %v2075 = vadd.f32 %v1849, %v2029
        %v2076 = vadd.f32 %v1850, %v2034
        %v2077 = vadd.f32 %v1851, %v2037
        %v2078 = vadd.f32 %v1852, %v2042
        %v2079 = vadd.f32 %v1853, %v2045
        %v2081 = vrot.slane %v271, 5
        %v2082 = vrot.slane %v2081, 4
        %v2083 = vrot.slane %v272, 5
        %v2084 = vsel %vm1245, %v2082, %v2083
        %v2085 = vrot.slane %v2083, 4
        %v2086 = vrot.slane %v273, 5
        %v2087 = vsel %vm1245, %v2085, %v2086
        %v2088 = vunpack.c.l.b16 %v2084
        %v2089 = vunpack.c.l.b16 %v2087
        %v2090 = vpack.c.b16 %v2089, %v2088
        %v2092 = vsel %vm721, %v2090, 0
        %v2095 = vsel %vm770, %v282, 0
        %2097 = vmatprep.subr.bf16.mxu0 0
        %2098 = vmatpush1.bf16.msra.mxu0 %v2095
        %2099 = vmatprep.subr.bf16.mxu0 0
        %2100 = vmatpush1.bf16.msra.mxu0 0
        %2101 = vmatprep.subr.bf16.mxu0 0
        %2102 = vmatpush1.bf16.msra.mxu0 0
        %2103 = vmatprep.subr.bf16.mxu0 0
        %2104 = vmatpush1.bf16.msra.mxu0 0
        %2105 = vmatprep.subr.bf16.mxu0 0
        %2106 = vmatpush1.bf16.msra.mxu0 0
        %2107 = vmatprep.subr.bf16.mxu0 0
        %2108 = vmatpush1.bf16.msra.mxu0 0
        %2109 = vmatprep.subr.bf16.mxu0 0
        %2110 = vmatpush1.bf16.msra.mxu0 0
        %2111 = vmatprep.subr.bf16.mxu0 0
        %2112 = vmatpush1.bf16.msra.mxu0 0
        %2113 = vmatprep.subr.bf16.mxu0 0
        %2114 = vmatpush1.bf16.msra.mxu0 0
        %2115 = vmatprep.subr.bf16.mxu0 0
        %2116 = vmatpush1.bf16.msra.mxu0 0
        %2117 = vmatprep.subr.bf16.mxu0 0
        %2118 = vmatpush1.bf16.msra.mxu0 0
        %2119 = vmatprep.subr.bf16.mxu0 0
        %2120 = vmatpush1.bf16.msra.mxu0 0
        %2121 = vmatprep.subr.bf16.mxu0 0
        %2122 = vmatpush1.bf16.msra.mxu0 0
        %2123 = vmatprep.subr.bf16.mxu0 0
        %2124 = vmatpush1.bf16.msra.mxu0 0
        %2125 = vmatprep.subr.bf16.mxu0 0
        %2126 = vmatpush1.bf16.msra.mxu0 0
        %2127 = vmatprep.subr.bf16.mxu0 0
        %2128 = vmatpush1.bf16.msra.mxu0 0
        %2129 = vmatprep.mubr.bf16.mxu0 0
        %2130 = vmatmul.mubr.bf16.gmra.mrb[0].mxu0 %v1410
        %v2131 = vpop.f32.mrb[0].mxu0
        %v2132 = vadd.f32 0.0, %v2131
        %v2133 = vpop.f32.mrb[0].mxu0
        %v2134 = vpop.f32.mrb[0].mxu0
        %v2135 = vadd.f32 0.0, %v2134
        %v2136 = vpop.f32.mrb[0].mxu0
        %2137 = vmatprep.mubr.bf16.mxu0 0
        %2138 = vmatmul.mubr.bf16.gmra.mrb[0].mxu0 %v1413
        %v2139 = vpop.f32.mrb[0].mxu0
        %v2140 = vadd.f32 0.0, %v2139
        %v2141 = vpop.f32.mrb[0].mxu0
        %v2142 = vpop.f32.mrb[0].mxu0
        %v2143 = vadd.f32 0.0, %v2142
        %v2144 = vpop.f32.mrb[0].mxu0
        %2145 = vmatprep.mubr.bf16.mxu0 0
        %2146 = vmatmul.mubr.bf16.gmra.mrb[0].mxu0 %v1416
        %v2147 = vpop.f32.mrb[0].mxu0
        %v2148 = vadd.f32 0.0, %v2147
        %v2149 = vpop.f32.mrb[0].mxu0
        %v2150 = vpop.f32.mrb[0].mxu0
        %v2151 = vadd.f32 0.0, %v2150
        %v2152 = vpop.f32.mrb[0].mxu0
        %2153 = vmatprep.mubr.bf16.mxu0 0
        %2154 = vmatmul.mubr.bf16.gmra.mrb[0].mxu0 %v1419
        %v2155 = vpop.f32.mrb[0].mxu0
        %v2156 = vadd.f32 0.0, %v2155
        %v2157 = vpop.f32.mrb[0].mxu0
        %v2158 = vpop.f32.mrb[0].mxu0
        %v2159 = vadd.f32 0.0, %v2158
        %v2160 = vpop.f32.mrb[0].mxu0
        %2161 = vmatprep.mubr.bf16.mxu0 0
        %2162 = vmatmul.mubr.bf16.gmra.mrb[0].mxu0 %v1422
        %v2163 = vpop.f32.mrb[0].mxu0
        %v2164 = vadd.f32 0.0, %v2163
        %v2165 = vpop.f32.mrb[0].mxu0
        %v2166 = vpop.f32.mrb[0].mxu0
        %v2167 = vadd.f32 0.0, %v2166
        %v2168 = vpop.f32.mrb[0].mxu0
        %2169 = vmatprep.mubr.bf16.mxu0 0
        %2170 = vmatmul.mubr.bf16.gmra.mrb[0].mxu0 %v1425
        %v2171 = vpop.f32.mrb[0].mxu0
        %v2172 = vadd.f32 0.0, %v2171
        %v2173 = vpop.f32.mrb[0].mxu0
        %v2174 = vpop.f32.mrb[0].mxu0
        %v2175 = vadd.f32 0.0, %v2174
        %v2176 = vpop.f32.mrb[0].mxu0
        %2177 = vmatprep.mubr.bf16.mxu0 0
        %2178 = vmatmul.mubr.bf16.gmra.mrb[0].mxu0 %v1428
        %v2179 = vpop.f32.mrb[0].mxu0
        %v2180 = vadd.f32 0.0, %v2179
        %v2181 = vpop.f32.mrb[0].mxu0
        %v2182 = vpop.f32.mrb[0].mxu0
        %v2183 = vadd.f32 0.0, %v2182
        %v2184 = vpop.f32.mrb[0].mxu0
        %2185 = vmatprep.mubr.bf16.mxu0 0
        %2186 = vmatmul.mubr.bf16.gmra.mrb[0].mxu0 %v1431
        %v2187 = vpop.f32.mrb[0].mxu0
        %v2188 = vadd.f32 0.0, %v2187
        %v2189 = vpop.f32.mrb[0].mxu0
        %v2190 = vpop.f32.mrb[0].mxu0
        %v2191 = vadd.f32 0.0, %v2190
        %v2192 = vpop.f32.mrb[0].mxu0
        %2193 = vmatprep.mubr.bf16.mxu0 0
        %2194 = vmatmul.mubr.bf16.gmra.mrb[0].mxu0 %v1434
        %v2195 = vpop.f32.mrb[0].mxu0
        %v2196 = vadd.f32 0.0, %v2195
        %v2197 = vpop.f32.mrb[0].mxu0
        %v2198 = vpop.f32.mrb[0].mxu0
        %v2199 = vadd.f32 0.0, %v2198
        %v2200 = vpop.f32.mrb[0].mxu0
        %2201 = vmatprep.mubr.bf16.mxu0 0
        %2202 = vmatmul.mubr.bf16.gmra.mrb[0].mxu0 %v1437
        %v2203 = vpop.f32.mrb[0].mxu0
        %v2204 = vadd.f32 0.0, %v2203
        %v2205 = vpop.f32.mrb[0].mxu0
        %v2206 = vpop.f32.mrb[0].mxu0
        %v2207 = vadd.f32 0.0, %v2206
        %v2208 = vpop.f32.mrb[0].mxu0
        %2209 = vmatprep.mubr.bf16.mxu0 0
        %2210 = vmatmul.mubr.bf16.gmra.mrb[0].mxu0 %v1440
        %v2211 = vpop.f32.mrb[0].mxu0
        %v2212 = vadd.f32 0.0, %v2211
        %v2213 = vpop.f32.mrb[0].mxu0
        %v2214 = vpop.f32.mrb[0].mxu0
        %v2215 = vadd.f32 0.0, %v2214
        %v2216 = vpop.f32.mrb[0].mxu0
        %2217 = vmatprep.mubr.bf16.mxu0 0
        %2218 = vmatmul.mubr.bf16.gmra.mrb[0].mxu0 %v1443
        %v2219 = vpop.f32.mrb[0].mxu0
        %v2220 = vadd.f32 0.0, %v2219
        %v2221 = vpop.f32.mrb[0].mxu0
        %v2222 = vpop.f32.mrb[0].mxu0
        %v2223 = vadd.f32 0.0, %v2222
        %v2224 = vpop.f32.mrb[0].mxu0
        %2225 = vmatprep.mubr.bf16.mxu0 0
        %2226 = vmatmul.mubr.bf16.gmra.mrb[0].mxu0 %v1446
        %v2227 = vpop.f32.mrb[0].mxu0
        %v2228 = vadd.f32 0.0, %v2227
        %v2229 = vpop.f32.mrb[0].mxu0
        %v2230 = vpop.f32.mrb[0].mxu0
        %v2231 = vadd.f32 0.0, %v2230
        %v2232 = vpop.f32.mrb[0].mxu0
        %2233 = vmatprep.mubr.bf16.mxu0 0
        %2234 = vmatmul.mubr.bf16.gmra.mrb[0].mxu0 %v1449
        %v2235 = vpop.f32.mrb[0].mxu0
        %v2236 = vadd.f32 0.0, %v2235
        %v2237 = vpop.f32.mrb[0].mxu0
        %v2238 = vpop.f32.mrb[0].mxu0
        %v2239 = vadd.f32 0.0, %v2238
        %v2240 = vpop.f32.mrb[0].mxu0
        %2241 = vmatprep.mubr.bf16.mxu0 0
        %2242 = vmatmul.mubr.bf16.gmra.mrb[0].mxu0 %v1452
        %v2243 = vpop.f32.mrb[0].mxu0
        %v2244 = vadd.f32 0.0, %v2243
        %v2245 = vpop.f32.mrb[0].mxu0
        %v2246 = vpop.f32.mrb[0].mxu0
        %v2247 = vadd.f32 0.0, %v2246
        %v2248 = vpop.f32.mrb[0].mxu0
        %2249 = vmatprep.mubr.bf16.mxu0 0
        %2250 = vmatmul.mubr.bf16.gmra.mrb[0].mxu0 %v2092
        %v2251 = vpop.f32.mrb[0].mxu0
        %v2252 = vadd.f32 0.0, %v2251
        %v2253 = vpop.f32.mrb[0].mxu0
        %v2254 = vpop.f32.mrb[0].mxu0
        %v2255 = vadd.f32 0.0, %v2254
        %v2256 = vpop.f32.mrb[0].mxu0
        %2257 = vdwg.mxu0
        %v2258 = vadd.f32 %v2048, %v2132
        %v2259 = vadd.f32 %v2049, %v2135
        %v2260 = vadd.f32 %v2050, %v2140
        %v2261 = vadd.f32 %v2051, %v2143
        %v2262 = vadd.f32 %v2052, %v2148
        %v2263 = vadd.f32 %v2053, %v2151
        %v2264 = vadd.f32 %v2054, %v2156
        %v2265 = vadd.f32 %v2055, %v2159
        %v2266 = vadd.f32 %v2056, %v2164
        %v2267 = vadd.f32 %v2057, %v2167
        %v2268 = vadd.f32 %v2058, %v2172
        %v2269 = vadd.f32 %v2059, %v2175
        %v2270 = vadd.f32 %v2060, %v2180
        %v2271 = vadd.f32 %v2061, %v2183
        %v2272 = vadd.f32 %v2062, %v2188
        %v2273 = vadd.f32 %v2063, %v2191
        %v2274 = vadd.f32 %v2064, %v2196
        %v2275 = vadd.f32 %v2065, %v2199
        %v2276 = vadd.f32 %v2066, %v2204
        %v2277 = vadd.f32 %v2067, %v2207
        %v2278 = vadd.f32 %v2068, %v2212
        %v2279 = vadd.f32 %v2069, %v2215
        %v2280 = vadd.f32 %v2070, %v2220
        %v2281 = vadd.f32 %v2071, %v2223
        %v2282 = vadd.f32 %v2072, %v2228
        %v2283 = vadd.f32 %v2073, %v2231
        %v2284 = vadd.f32 %v2074, %v2236
        %v2285 = vadd.f32 %v2075, %v2239
        %v2286 = vadd.f32 %v2076, %v2244
        %v2287 = vadd.f32 %v2077, %v2247
        %v2288 = vadd.f32 %v2078, %v2252
        %v2289 = vadd.f32 %v2079, %v2255
        %v2292 = vunpack.c.l.b16 %v274
        %v2293 = vunpack.c.l.b16 %v275
        %v2294 = vpack.c.b16 %v2293, %v2292
        %v2296 = vsel %vm721, %v2294, 0
        %v2299 = vsel %vm770, %v283, 0
        %2301 = vmatprep.subr.bf16.mxu0 0
        %2302 = vmatpush1.bf16.msra.mxu0 %v2299
        %2303 = vmatprep.subr.bf16.mxu0 0
        %2304 = vmatpush1.bf16.msra.mxu0 0
        %2305 = vmatprep.subr.bf16.mxu0 0
        %2306 = vmatpush1.bf16.msra.mxu0 0
        %2307 = vmatprep.subr.bf16.mxu0 0
        %2308 = vmatpush1.bf16.msra.mxu0 0
        %2309 = vmatprep.subr.bf16.mxu0 0
        %2310 = vmatpush1.bf16.msra.mxu0 0
        %2311 = vmatprep.subr.bf16.mxu0 0
        %2312 = vmatpush1.bf16.msra.mxu0 0
        %2313 = vmatprep.subr.bf16.mxu0 0
        %2314 = vmatpush1.bf16.msra.mxu0 0
        %2315 = vmatprep.subr.bf16.mxu0 0
        %2316 = vmatpush1.bf16.msra.mxu0 0
        %2317 = vmatprep.subr.bf16.mxu0 0
        %2318 = vmatpush1.bf16.msra.mxu0 0
        %2319 = vmatprep.subr.bf16.mxu0 0
        %2320 = vmatpush1.bf16.msra.mxu0 0
        %2321 = vmatprep.subr.bf16.mxu0 0
        %2322 = vmatpush1.bf16.msra.mxu0 0
        %2323 = vmatprep.subr.bf16.mxu0 0
        %2324 = vmatpush1.bf16.msra.mxu0 0
        %2325 = vmatprep.subr.bf16.mxu0 0
        %2326 = vmatpush1.bf16.msra.mxu0 0
        %2327 = vmatprep.subr.bf16.mxu0 0
        %2328 = vmatpush1.bf16.msra.mxu0 0
        %2329 = vmatprep.subr.bf16.mxu0 0
        %2330 = vmatpush1.bf16.msra.mxu0 0
        %2331 = vmatprep.subr.bf16.mxu0 0
        %2332 = vmatpush1.bf16.msra.mxu0 0
        %2333 = vmatprep.mubr.bf16.mxu0 0
        %2334 = vmatmul.mubr.bf16.gmra.mrb[0].mxu0 %v1022
        %v2335 = vpop.f32.mrb[0].mxu0
        %v2336 = vadd.f32 0.0, %v2335
        %v2337 = vpop.f32.mrb[0].mxu0
        %v2338 = vpop.f32.mrb[0].mxu0
        %v2339 = vadd.f32 0.0, %v2338
        %v2340 = vpop.f32.mrb[0].mxu0
        %2341 = vmatprep.mubr.bf16.mxu0 0
        %2342 = vmatmul.mubr.bf16.gmra.mrb[0].mxu0 %v1025
        %v2343 = vpop.f32.mrb[0].mxu0
        %v2344 = vadd.f32 0.0, %v2343
        %v2345 = vpop.f32.mrb[0].mxu0
        %v2346 = vpop.f32.mrb[0].mxu0
        %v2347 = vadd.f32 0.0, %v2346
        %v2348 = vpop.f32.mrb[0].mxu0
        %2349 = vmatprep.mubr.bf16.mxu0 0
        %2350 = vmatmul.mubr.bf16.gmra.mrb[0].mxu0 %v1028
        %v2351 = vpop.f32.mrb[0].mxu0
        %v2352 = vadd.f32 0.0, %v2351
        %v2353 = vpop.f32.mrb[0].mxu0
        %v2354 = vpop.f32.mrb[0].mxu0
        %v2355 = vadd.f32 0.0, %v2354
        %v2356 = vpop.f32.mrb[0].mxu0
        %2357 = vmatprep.mubr.bf16.mxu0 0
        %2358 = vmatmul.mubr.bf16.gmra.mrb[0].mxu0 %v1031
        %v2359 = vpop.f32.mrb[0].mxu0
        %v2360 = vadd.f32 0.0, %v2359
        %v2361 = vpop.f32.mrb[0].mxu0
        %v2362 = vpop.f32.mrb[0].mxu0
        %v2363 = vadd.f32 0.0, %v2362
        %v2364 = vpop.f32.mrb[0].mxu0
        %2365 = vmatprep.mubr.bf16.mxu0 0
        %2366 = vmatmul.mubr.bf16.gmra.mrb[0].mxu0 %v1034
        %v2367 = vpop.f32.mrb[0].mxu0
        %v2368 = vadd.f32 0.0, %v2367
        %v2369 = vpop.f32.mrb[0].mxu0
        %v2370 = vpop.f32.mrb[0].mxu0
        %v2371 = vadd.f32 0.0, %v2370
        %v2372 = vpop.f32.mrb[0].mxu0
        %2373 = vmatprep.mubr.bf16.mxu0 0
        %2374 = vmatmul.mubr.bf16.gmra.mrb[0].mxu0 %v1037
        %v2375 = vpop.f32.mrb[0].mxu0
        %v2376 = vadd.f32 0.0, %v2375
        %v2377 = vpop.f32.mrb[0].mxu0
        %v2378 = vpop.f32.mrb[0].mxu0
        %v2379 = vadd.f32 0.0, %v2378
        %v2380 = vpop.f32.mrb[0].mxu0
        %2381 = vmatprep.mubr.bf16.mxu0 0
        %2382 = vmatmul.mubr.bf16.gmra.mrb[0].mxu0 %v1040
        %v2383 = vpop.f32.mrb[0].mxu0
        %v2384 = vadd.f32 0.0, %v2383
        %v2385 = vpop.f32.mrb[0].mxu0
        %v2386 = vpop.f32.mrb[0].mxu0
        %v2387 = vadd.f32 0.0, %v2386
        %v2388 = vpop.f32.mrb[0].mxu0
        %2389 = vmatprep.mubr.bf16.mxu0 0
        %2390 = vmatmul.mubr.bf16.gmra.mrb[0].mxu0 %v1043
        %v2391 = vpop.f32.mrb[0].mxu0
        %v2392 = vadd.f32 0.0, %v2391
        %v2393 = vpop.f32.mrb[0].mxu0
        %v2394 = vpop.f32.mrb[0].mxu0
        %v2395 = vadd.f32 0.0, %v2394
        %v2396 = vpop.f32.mrb[0].mxu0
        %2397 = vmatprep.mubr.bf16.mxu0 0
        %2398 = vmatmul.mubr.bf16.gmra.mrb[0].mxu0 %v1046
        %v2399 = vpop.f32.mrb[0].mxu0
        %v2400 = vadd.f32 0.0, %v2399
        %v2401 = vpop.f32.mrb[0].mxu0
        %v2402 = vpop.f32.mrb[0].mxu0
        %v2403 = vadd.f32 0.0, %v2402
        %v2404 = vpop.f32.mrb[0].mxu0
        %2405 = vmatprep.mubr.bf16.mxu0 0
        %2406 = vmatmul.mubr.bf16.gmra.mrb[0].mxu0 %v1049
        %v2407 = vpop.f32.mrb[0].mxu0
        %v2408 = vadd.f32 0.0, %v2407
        %v2409 = vpop.f32.mrb[0].mxu0
        %v2410 = vpop.f32.mrb[0].mxu0
        %v2411 = vadd.f32 0.0, %v2410
        %v2412 = vpop.f32.mrb[0].mxu0
        %2413 = vmatprep.mubr.bf16.mxu0 0
        %2414 = vmatmul.mubr.bf16.gmra.mrb[0].mxu0 %v1052
        %v2415 = vpop.f32.mrb[0].mxu0
        %v2416 = vadd.f32 0.0, %v2415
        %v2417 = vpop.f32.mrb[0].mxu0
        %v2418 = vpop.f32.mrb[0].mxu0
        %v2419 = vadd.f32 0.0, %v2418
        %v2420 = vpop.f32.mrb[0].mxu0
        %2421 = vmatprep.mubr.bf16.mxu0 0
        %2422 = vmatmul.mubr.bf16.gmra.mrb[0].mxu0 %v1055
        %v2423 = vpop.f32.mrb[0].mxu0
        %v2424 = vadd.f32 0.0, %v2423
        %v2425 = vpop.f32.mrb[0].mxu0
        %v2426 = vpop.f32.mrb[0].mxu0
        %v2427 = vadd.f32 0.0, %v2426
        %v2428 = vpop.f32.mrb[0].mxu0
        %2429 = vmatprep.mubr.bf16.mxu0 0
        %2430 = vmatmul.mubr.bf16.gmra.mrb[0].mxu0 %v1058
        %v2431 = vpop.f32.mrb[0].mxu0
        %v2432 = vadd.f32 0.0, %v2431
        %v2433 = vpop.f32.mrb[0].mxu0
        %v2434 = vpop.f32.mrb[0].mxu0
        %v2435 = vadd.f32 0.0, %v2434
        %v2436 = vpop.f32.mrb[0].mxu0
        %2437 = vmatprep.mubr.bf16.mxu0 0
        %2438 = vmatmul.mubr.bf16.gmra.mrb[0].mxu0 %v1061
        %v2439 = vpop.f32.mrb[0].mxu0
        %v2440 = vadd.f32 0.0, %v2439
        %v2441 = vpop.f32.mrb[0].mxu0
        %v2442 = vpop.f32.mrb[0].mxu0
        %v2443 = vadd.f32 0.0, %v2442
        %v2444 = vpop.f32.mrb[0].mxu0
        %2445 = vmatprep.mubr.bf16.mxu0 0
        %2446 = vmatmul.mubr.bf16.gmra.mrb[0].mxu0 %v1656
        %v2447 = vpop.f32.mrb[0].mxu0
        %v2448 = vadd.f32 0.0, %v2447
        %v2449 = vpop.f32.mrb[0].mxu0
        %v2450 = vpop.f32.mrb[0].mxu0
        %v2451 = vadd.f32 0.0, %v2450
        %v2452 = vpop.f32.mrb[0].mxu0
        %2453 = vmatprep.mubr.bf16.mxu0 0
        %2454 = vmatmul.mubr.bf16.gmra.mrb[0].mxu0 %v2296
        %v2455 = vpop.f32.mrb[0].mxu0
        %v2456 = vadd.f32 0.0, %v2455
        %v2457 = vpop.f32.mrb[0].mxu0
        %v2458 = vpop.f32.mrb[0].mxu0
        %v2459 = vadd.f32 0.0, %v2458
        %v2460 = vpop.f32.mrb[0].mxu0
        %2461 = vdwg.mxu0
        %v2462 = vadd.f32 %v2258, %v2336
        %v2463 = vadd.f32 %v2259, %v2339
        %v2464 = vadd.f32 %v2260, %v2344
        %v2465 = vadd.f32 %v2261, %v2347
        %v2466 = vadd.f32 %v2262, %v2352
        %v2467 = vadd.f32 %v2263, %v2355
        %v2468 = vadd.f32 %v2264, %v2360
        %v2469 = vadd.f32 %v2265, %v2363
        %v2470 = vadd.f32 %v2266, %v2368
        %v2471 = vadd.f32 %v2267, %v2371
        %v2472 = vadd.f32 %v2268, %v2376
        %v2473 = vadd.f32 %v2269, %v2379
        %v2474 = vadd.f32 %v2270, %v2384
        %v2475 = vadd.f32 %v2271, %v2387
        %v2476 = vadd.f32 %v2272, %v2392
        %v2477 = vadd.f32 %v2273, %v2395
        %v2478 = vadd.f32 %v2274, %v2400
        %v2479 = vadd.f32 %v2275, %v2403
        %v2480 = vadd.f32 %v2276, %v2408
        %v2481 = vadd.f32 %v2277, %v2411
        %v2482 = vadd.f32 %v2278, %v2416
        %v2483 = vadd.f32 %v2279, %v2419
        %v2484 = vadd.f32 %v2280, %v2424
        %v2485 = vadd.f32 %v2281, %v2427
        %v2486 = vadd.f32 %v2282, %v2432
        %v2487 = vadd.f32 %v2283, %v2435
        %v2488 = vadd.f32 %v2284, %v2440
        %v2489 = vadd.f32 %v2285, %v2443
        %v2490 = vadd.f32 %v2286, %v2448
        %v2491 = vadd.f32 %v2287, %v2451
        %v2492 = vadd.f32 %v2288, %v2456
        %v2493 = vadd.f32 %v2289, %v2459
        %v2495 = vshrl.u32 %v274, 16
        %v2497 = vrot.slane %v2495, 4
        %v2498 = vshll.u32 %v274, 16
        %v2500 = vrot.slane %v2498, 5
        %v2501 = vor.u32 %v2497, %v2500
        %v2502 = vrot.slane %v2501, 4
        %v2504 = vshll.u32 %v275, 16
        %v2506 = vrot.slane %v2504, 5
        %v2507 = vsel %vm288, %v2502, %v2506
        %v2508 = vshrl.u32 %v275, 16
        %v2510 = vrot.slane %v2508, 4
        %v2511 = vor.u32 %v2510, %v2506
        %v2512 = vrot.slane %v2511, 4
        %v2514 = vshll.u32 %v276, 16
        %v2516 = vrot.slane %v2514, 5
        %v2517 = vsel %vm288, %v2512, %v2516
        %v2518 = vunpack.c.l.b16 %v2507
        %v2519 = vunpack.c.l.b16 %v2517
        %v2520 = vpack.c.b16 %v2519, %v2518
        %v2522 = vsel %vm721, %v2520, 0
        %v2525 = vsel %vm770, %v284, 0
        %2527 = vmatprep.subr.bf16.mxu0 0
        %2528 = vmatpush1.bf16.msra.mxu0 %v2525
        %2529 = vmatprep.subr.bf16.mxu0 0
        %2530 = vmatpush1.bf16.msra.mxu0 0
        %2531 = vmatprep.subr.bf16.mxu0 0
        %2532 = vmatpush1.bf16.msra.mxu0 0
        %2533 = vmatprep.subr.bf16.mxu0 0
        %2534 = vmatpush1.bf16.msra.mxu0 0
        %2535 = vmatprep.subr.bf16.mxu0 0
        %2536 = vmatpush1.bf16.msra.mxu0 0
        %2537 = vmatprep.subr.bf16.mxu0 0
        %2538 = vmatpush1.bf16.msra.mxu0 0
        %2539 = vmatprep.subr.bf16.mxu0 0
        %2540 = vmatpush1.bf16.msra.mxu0 0
        %2541 = vmatprep.subr.bf16.mxu0 0
        %2542 = vmatpush1.bf16.msra.mxu0 0
        %2543 = vmatprep.subr.bf16.mxu0 0
        %2544 = vmatpush1.bf16.msra.mxu0 0
        %2545 = vmatprep.subr.bf16.mxu0 0
        %2546 = vmatpush1.bf16.msra.mxu0 0
        %2547 = vmatprep.subr.bf16.mxu0 0
        %2548 = vmatpush1.bf16.msra.mxu0 0
        %2549 = vmatprep.subr.bf16.mxu0 0
        %2550 = vmatpush1.bf16.msra.mxu0 0
        %2551 = vmatprep.subr.bf16.mxu0 0
        %2552 = vmatpush1.bf16.msra.mxu0 0
        %2553 = vmatprep.subr.bf16.mxu0 0
        %2554 = vmatpush1.bf16.msra.mxu0 0
        %2555 = vmatprep.subr.bf16.mxu0 0
        %2556 = vmatpush1.bf16.msra.mxu0 0
        %2557 = vmatprep.subr.bf16.mxu0 0
        %2558 = vmatpush1.bf16.msra.mxu0 0
        %2559 = vmatprep.mubr.bf16.mxu0 0
        %2560 = vmatmul.mubr.bf16.gmra.mrb[0].mxu0 %v729
        %v2561 = vpop.f32.mrb[0].mxu0
        %v2562 = vadd.f32 0.0, %v2561
        %v2563 = vpop.f32.mrb[0].mxu0
        %v2564 = vpop.f32.mrb[0].mxu0
        %v2565 = vadd.f32 0.0, %v2564
        %v2566 = vpop.f32.mrb[0].mxu0
        %2567 = vmatprep.mubr.bf16.mxu0 0
        %2568 = vmatmul.mubr.bf16.gmra.mrb[0].mxu0 %v732
        %v2569 = vpop.f32.mrb[0].mxu0
        %v2570 = vadd.f32 0.0, %v2569
        %v2571 = vpop.f32.mrb[0].mxu0
        %v2572 = vpop.f32.mrb[0].mxu0
        %v2573 = vadd.f32 0.0, %v2572
        %v2574 = vpop.f32.mrb[0].mxu0
        %2575 = vmatprep.mubr.bf16.mxu0 0
        %2576 = vmatmul.mubr.bf16.gmra.mrb[0].mxu0 %v735
        %v2577 = vpop.f32.mrb[0].mxu0
        %v2578 = vadd.f32 0.0, %v2577
        %v2579 = vpop.f32.mrb[0].mxu0
        %v2580 = vpop.f32.mrb[0].mxu0
        %v2581 = vadd.f32 0.0, %v2580
        %v2582 = vpop.f32.mrb[0].mxu0
        %2583 = vmatprep.mubr.bf16.mxu0 0
        %2584 = vmatmul.mubr.bf16.gmra.mrb[0].mxu0 %v738
        %v2585 = vpop.f32.mrb[0].mxu0
        %v2586 = vadd.f32 0.0, %v2585
        %v2587 = vpop.f32.mrb[0].mxu0
        %v2588 = vpop.f32.mrb[0].mxu0
        %v2589 = vadd.f32 0.0, %v2588
        %v2590 = vpop.f32.mrb[0].mxu0
        %2591 = vmatprep.mubr.bf16.mxu0 0
        %2592 = vmatmul.mubr.bf16.gmra.mrb[0].mxu0 %v741
        %v2593 = vpop.f32.mrb[0].mxu0
        %v2594 = vadd.f32 0.0, %v2593
        %v2595 = vpop.f32.mrb[0].mxu0
        %v2596 = vpop.f32.mrb[0].mxu0
        %v2597 = vadd.f32 0.0, %v2596
        %v2598 = vpop.f32.mrb[0].mxu0
        %2599 = vmatprep.mubr.bf16.mxu0 0
        %2600 = vmatmul.mubr.bf16.gmra.mrb[0].mxu0 %v744
        %v2601 = vpop.f32.mrb[0].mxu0
        %v2602 = vadd.f32 0.0, %v2601
        %v2603 = vpop.f32.mrb[0].mxu0
        %v2604 = vpop.f32.mrb[0].mxu0
        %v2605 = vadd.f32 0.0, %v2604
        %v2606 = vpop.f32.mrb[0].mxu0
        %2607 = vmatprep.mubr.bf16.mxu0 0
        %2608 = vmatmul.mubr.bf16.gmra.mrb[0].mxu0 %v747
        %v2609 = vpop.f32.mrb[0].mxu0
        %v2610 = vadd.f32 0.0, %v2609
        %v2611 = vpop.f32.mrb[0].mxu0
        %v2612 = vpop.f32.mrb[0].mxu0
        %v2613 = vadd.f32 0.0, %v2612
        %v2614 = vpop.f32.mrb[0].mxu0
        %2615 = vmatprep.mubr.bf16.mxu0 0
        %2616 = vmatmul.mubr.bf16.gmra.mrb[0].mxu0 %v750
        %v2617 = vpop.f32.mrb[0].mxu0
        %v2618 = vadd.f32 0.0, %v2617
        %v2619 = vpop.f32.mrb[0].mxu0
        %v2620 = vpop.f32.mrb[0].mxu0
        %v2621 = vadd.f32 0.0, %v2620
        %v2622 = vpop.f32.mrb[0].mxu0
        %2623 = vmatprep.mubr.bf16.mxu0 0
        %2624 = vmatmul.mubr.bf16.gmra.mrb[0].mxu0 %v753
        %v2625 = vpop.f32.mrb[0].mxu0
        %v2626 = vadd.f32 0.0, %v2625
        %v2627 = vpop.f32.mrb[0].mxu0
        %v2628 = vpop.f32.mrb[0].mxu0
        %v2629 = vadd.f32 0.0, %v2628
        %v2630 = vpop.f32.mrb[0].mxu0
        %2631 = vmatprep.mubr.bf16.mxu0 0
        %2632 = vmatmul.mubr.bf16.gmra.mrb[0].mxu0 %v756
        %v2633 = vpop.f32.mrb[0].mxu0
        %v2634 = vadd.f32 0.0, %v2633
        %v2635 = vpop.f32.mrb[0].mxu0
        %v2636 = vpop.f32.mrb[0].mxu0
        %v2637 = vadd.f32 0.0, %v2636
        %v2638 = vpop.f32.mrb[0].mxu0
        %2639 = vmatprep.mubr.bf16.mxu0 0
        %2640 = vmatmul.mubr.bf16.gmra.mrb[0].mxu0 %v759
        %v2641 = vpop.f32.mrb[0].mxu0
        %v2642 = vadd.f32 0.0, %v2641
        %v2643 = vpop.f32.mrb[0].mxu0
        %v2644 = vpop.f32.mrb[0].mxu0
        %v2645 = vadd.f32 0.0, %v2644
        %v2646 = vpop.f32.mrb[0].mxu0
        %2647 = vmatprep.mubr.bf16.mxu0 0
        %2648 = vmatmul.mubr.bf16.gmra.mrb[0].mxu0 %v762
        %v2649 = vpop.f32.mrb[0].mxu0
        %v2650 = vadd.f32 0.0, %v2649
        %v2651 = vpop.f32.mrb[0].mxu0
        %v2652 = vpop.f32.mrb[0].mxu0
        %v2653 = vadd.f32 0.0, %v2652
        %v2654 = vpop.f32.mrb[0].mxu0
        %2655 = vmatprep.mubr.bf16.mxu0 0
        %2656 = vmatmul.mubr.bf16.gmra.mrb[0].mxu0 %v765
        %v2657 = vpop.f32.mrb[0].mxu0
        %v2658 = vadd.f32 0.0, %v2657
        %v2659 = vpop.f32.mrb[0].mxu0
        %v2660 = vpop.f32.mrb[0].mxu0
        %v2661 = vadd.f32 0.0, %v2660
        %v2662 = vpop.f32.mrb[0].mxu0
        %2663 = vmatprep.mubr.bf16.mxu0 0
        %2664 = vmatmul.mubr.bf16.gmra.mrb[0].mxu0 %v768
        %v2665 = vpop.f32.mrb[0].mxu0
        %v2666 = vadd.f32 0.0, %v2665
        %v2667 = vpop.f32.mrb[0].mxu0
        %v2668 = vpop.f32.mrb[0].mxu0
        %v2669 = vadd.f32 0.0, %v2668
        %v2670 = vpop.f32.mrb[0].mxu0
        %2671 = vmatprep.mubr.bf16.mxu0 0
        %2672 = vmatmul.mubr.bf16.gmra.mrb[0].mxu0 %v1882
        %v2673 = vpop.f32.mrb[0].mxu0
        %v2674 = vadd.f32 0.0, %v2673
        %v2675 = vpop.f32.mrb[0].mxu0
        %v2676 = vpop.f32.mrb[0].mxu0
        %v2677 = vadd.f32 0.0, %v2676
        %v2678 = vpop.f32.mrb[0].mxu0
        %2679 = vmatprep.mubr.bf16.mxu0 0
        %2680 = vmatmul.mubr.bf16.gmra.mrb[0].mxu0 %v2522
        %v2681 = vpop.f32.mrb[0].mxu0
        %v2682 = vadd.f32 0.0, %v2681
        %v2683 = vpop.f32.mrb[0].mxu0
        %v2684 = vpop.f32.mrb[0].mxu0
        %v2685 = vadd.f32 0.0, %v2684
        %v2686 = vpop.f32.mrb[0].mxu0
        %2687 = vdwg.mxu0
        %v2688 = vadd.f32 %v2462, %v2562
        %v2689 = vadd.f32 %v2463, %v2565
        %v2690 = vadd.f32 %v2464, %v2570
        %v2691 = vadd.f32 %v2465, %v2573
        %v2692 = vadd.f32 %v2466, %v2578
        %v2693 = vadd.f32 %v2467, %v2581
        %v2694 = vadd.f32 %v2468, %v2586
        %v2695 = vadd.f32 %v2469, %v2589
        %v2696 = vadd.f32 %v2470, %v2594
        %v2697 = vadd.f32 %v2471, %v2597
        %v2698 = vadd.f32 %v2472, %v2602
        %v2699 = vadd.f32 %v2473, %v2605
        %v2700 = vadd.f32 %v2474, %v2610
        %v2701 = vadd.f32 %v2475, %v2613
        %v2702 = vadd.f32 %v2476, %v2618
        %v2703 = vadd.f32 %v2477, %v2621
        %v2704 = vadd.f32 %v2478, %v2626
        %v2705 = vadd.f32 %v2479, %v2629
        %v2706 = vadd.f32 %v2480, %v2634
        %v2707 = vadd.f32 %v2481, %v2637
        %v2708 = vadd.f32 %v2482, %v2642
        %v2709 = vadd.f32 %v2483, %v2645
        %v2710 = vadd.f32 %v2484, %v2650
        %v2711 = vadd.f32 %v2485, %v2653
        %v2712 = vadd.f32 %v2486, %v2658
        %v2713 = vadd.f32 %v2487, %v2661
        %v2714 = vadd.f32 %v2488, %v2666
        %v2715 = vadd.f32 %v2489, %v2669
        %v2716 = vadd.f32 %v2490, %v2674
        %v2717 = vadd.f32 %v2491, %v2677
        %v2718 = vadd.f32 %v2492, %v2682
        %v2719 = vadd.f32 %v2493, %v2685
        %v2721 = vrot.slane %v274, 5
        %v2722 = vrot.slane %v2721, 4
        %v2723 = vrot.slane %v275, 5
        %v2724 = vsel %vm1245, %v2722, %v2723
        %v2725 = vrot.slane %v2723, 4
        %v2726 = vrot.slane %v276, 5
        %v2727 = vsel %vm1245, %v2725, %v2726
        %v2728 = vunpack.c.l.b16 %v2724
        %v2729 = vunpack.c.l.b16 %v2727
        %v2730 = vpack.c.b16 %v2729, %v2728
        %v2732 = vsel %vm721, %v2730, 0
        %v2735 = vsel %vm770, %v285, 0
        %2737 = vmatprep.subr.bf16.mxu0 0
        %2738 = vmatpush1.bf16.msra.mxu0 %v2735
        %2739 = vmatprep.subr.bf16.mxu0 0
        %2740 = vmatpush1.bf16.msra.mxu0 0
        %2741 = vmatprep.subr.bf16.mxu0 0
        %2742 = vmatpush1.bf16.msra.mxu0 0
        %2743 = vmatprep.subr.bf16.mxu0 0
        %2744 = vmatpush1.bf16.msra.mxu0 0
        %2745 = vmatprep.subr.bf16.mxu0 0
        %2746 = vmatpush1.bf16.msra.mxu0 0
        %2747 = vmatprep.subr.bf16.mxu0 0
        %2748 = vmatpush1.bf16.msra.mxu0 0
        %2749 = vmatprep.subr.bf16.mxu0 0
        %2750 = vmatpush1.bf16.msra.mxu0 0
        %2751 = vmatprep.subr.bf16.mxu0 0
        %2752 = vmatpush1.bf16.msra.mxu0 0
        %2753 = vmatprep.subr.bf16.mxu0 0
        %2754 = vmatpush1.bf16.msra.mxu0 0
        %2755 = vmatprep.subr.bf16.mxu0 0
        %2756 = vmatpush1.bf16.msra.mxu0 0
        %2757 = vmatprep.subr.bf16.mxu0 0
        %2758 = vmatpush1.bf16.msra.mxu0 0
        %2759 = vmatprep.subr.bf16.mxu0 0
        %2760 = vmatpush1.bf16.msra.mxu0 0
        %2761 = vmatprep.subr.bf16.mxu0 0
        %2762 = vmatpush1.bf16.msra.mxu0 0
        %2763 = vmatprep.subr.bf16.mxu0 0
        %2764 = vmatpush1.bf16.msra.mxu0 0
        %2765 = vmatprep.subr.bf16.mxu0 0
        %2766 = vmatpush1.bf16.msra.mxu0 0
        %2767 = vmatprep.subr.bf16.mxu0 0
        %2768 = vmatpush1.bf16.msra.mxu0 0
        %2769 = vmatprep.mubr.bf16.mxu0 0
        %2770 = vmatmul.mubr.bf16.gmra.mrb[0].mxu0 %v1413
        %v2771 = vpop.f32.mrb[0].mxu0
        %v2772 = vadd.f32 0.0, %v2771
        %v2773 = vpop.f32.mrb[0].mxu0
        %v2774 = vpop.f32.mrb[0].mxu0
        %v2775 = vadd.f32 0.0, %v2774
        %v2776 = vpop.f32.mrb[0].mxu0
        %2777 = vmatprep.mubr.bf16.mxu0 0
        %2778 = vmatmul.mubr.bf16.gmra.mrb[0].mxu0 %v1416
        %v2779 = vpop.f32.mrb[0].mxu0
        %v2780 = vadd.f32 0.0, %v2779
        %v2781 = vpop.f32.mrb[0].mxu0
        %v2782 = vpop.f32.mrb[0].mxu0
        %v2783 = vadd.f32 0.0, %v2782
        %v2784 = vpop.f32.mrb[0].mxu0
        %2785 = vmatprep.mubr.bf16.mxu0 0
        %2786 = vmatmul.mubr.bf16.gmra.mrb[0].mxu0 %v1419
        %v2787 = vpop.f32.mrb[0].mxu0
        %v2788 = vadd.f32 0.0, %v2787
        %v2789 = vpop.f32.mrb[0].mxu0
        %v2790 = vpop.f32.mrb[0].mxu0
        %v2791 = vadd.f32 0.0, %v2790
        %v2792 = vpop.f32.mrb[0].mxu0
        %2793 = vmatprep.mubr.bf16.mxu0 0
        %2794 = vmatmul.mubr.bf16.gmra.mrb[0].mxu0 %v1422
        %v2795 = vpop.f32.mrb[0].mxu0
        %v2796 = vadd.f32 0.0, %v2795
        %v2797 = vpop.f32.mrb[0].mxu0
        %v2798 = vpop.f32.mrb[0].mxu0
        %v2799 = vadd.f32 0.0, %v2798
        %v2800 = vpop.f32.mrb[0].mxu0
        %2801 = vmatprep.mubr.bf16.mxu0 0
        %2802 = vmatmul.mubr.bf16.gmra.mrb[0].mxu0 %v1425
        %v2803 = vpop.f32.mrb[0].mxu0
        %v2804 = vadd.f32 0.0, %v2803
        %v2805 = vpop.f32.mrb[0].mxu0
        %v2806 = vpop.f32.mrb[0].mxu0
        %v2807 = vadd.f32 0.0, %v2806
        %v2808 = vpop.f32.mrb[0].mxu0
        %2809 = vmatprep.mubr.bf16.mxu0 0
        %2810 = vmatmul.mubr.bf16.gmra.mrb[0].mxu0 %v1428
        %v2811 = vpop.f32.mrb[0].mxu0
        %v2812 = vadd.f32 0.0, %v2811
        %v2813 = vpop.f32.mrb[0].mxu0
        %v2814 = vpop.f32.mrb[0].mxu0
        %v2815 = vadd.f32 0.0, %v2814
        %v2816 = vpop.f32.mrb[0].mxu0
        %2817 = vmatprep.mubr.bf16.mxu0 0
        %2818 = vmatmul.mubr.bf16.gmra.mrb[0].mxu0 %v1431
        %v2819 = vpop.f32.mrb[0].mxu0
        %v2820 = vadd.f32 0.0, %v2819
        %v2821 = vpop.f32.mrb[0].mxu0
        %v2822 = vpop.f32.mrb[0].mxu0
        %v2823 = vadd.f32 0.0, %v2822
        %v2824 = vpop.f32.mrb[0].mxu0
        %2825 = vmatprep.mubr.bf16.mxu0 0
        %2826 = vmatmul.mubr.bf16.gmra.mrb[0].mxu0 %v1434
        %v2827 = vpop.f32.mrb[0].mxu0
        %v2828 = vadd.f32 0.0, %v2827
        %v2829 = vpop.f32.mrb[0].mxu0
        %v2830 = vpop.f32.mrb[0].mxu0
        %v2831 = vadd.f32 0.0, %v2830
        %v2832 = vpop.f32.mrb[0].mxu0
        %2833 = vmatprep.mubr.bf16.mxu0 0
        %2834 = vmatmul.mubr.bf16.gmra.mrb[0].mxu0 %v1437
        %v2835 = vpop.f32.mrb[0].mxu0
        %v2836 = vadd.f32 0.0, %v2835
        %v2837 = vpop.f32.mrb[0].mxu0
        %v2838 = vpop.f32.mrb[0].mxu0
        %v2839 = vadd.f32 0.0, %v2838
        %v2840 = vpop.f32.mrb[0].mxu0
        %2841 = vmatprep.mubr.bf16.mxu0 0
        %2842 = vmatmul.mubr.bf16.gmra.mrb[0].mxu0 %v1440
        %v2843 = vpop.f32.mrb[0].mxu0
        %v2844 = vadd.f32 0.0, %v2843
        %v2845 = vpop.f32.mrb[0].mxu0
        %v2846 = vpop.f32.mrb[0].mxu0
        %v2847 = vadd.f32 0.0, %v2846
        %v2848 = vpop.f32.mrb[0].mxu0
        %2849 = vmatprep.mubr.bf16.mxu0 0
        %2850 = vmatmul.mubr.bf16.gmra.mrb[0].mxu0 %v1443
        %v2851 = vpop.f32.mrb[0].mxu0
        %v2852 = vadd.f32 0.0, %v2851
        %v2853 = vpop.f32.mrb[0].mxu0
        %v2854 = vpop.f32.mrb[0].mxu0
        %v2855 = vadd.f32 0.0, %v2854
        %v2856 = vpop.f32.mrb[0].mxu0
        %2857 = vmatprep.mubr.bf16.mxu0 0
        %2858 = vmatmul.mubr.bf16.gmra.mrb[0].mxu0 %v1446
        %v2859 = vpop.f32.mrb[0].mxu0
        %v2860 = vadd.f32 0.0, %v2859
        %v2861 = vpop.f32.mrb[0].mxu0
        %v2862 = vpop.f32.mrb[0].mxu0
        %v2863 = vadd.f32 0.0, %v2862
        %v2864 = vpop.f32.mrb[0].mxu0
        %2865 = vmatprep.mubr.bf16.mxu0 0
        %2866 = vmatmul.mubr.bf16.gmra.mrb[0].mxu0 %v1449
        %v2867 = vpop.f32.mrb[0].mxu0
        %v2868 = vadd.f32 0.0, %v2867
        %v2869 = vpop.f32.mrb[0].mxu0
        %v2870 = vpop.f32.mrb[0].mxu0
        %v2871 = vadd.f32 0.0, %v2870
        %v2872 = vpop.f32.mrb[0].mxu0
        %2873 = vmatprep.mubr.bf16.mxu0 0
        %2874 = vmatmul.mubr.bf16.gmra.mrb[0].mxu0 %v1452
        %v2875 = vpop.f32.mrb[0].mxu0
        %v2876 = vadd.f32 0.0, %v2875
        %v2877 = vpop.f32.mrb[0].mxu0
        %v2878 = vpop.f32.mrb[0].mxu0
        %v2879 = vadd.f32 0.0, %v2878
        %v2880 = vpop.f32.mrb[0].mxu0
        %2881 = vmatprep.mubr.bf16.mxu0 0
        %2882 = vmatmul.mubr.bf16.gmra.mrb[0].mxu0 %v2092
        %v2883 = vpop.f32.mrb[0].mxu0
        %v2884 = vadd.f32 0.0, %v2883
        %v2885 = vpop.f32.mrb[0].mxu0
        %v2886 = vpop.f32.mrb[0].mxu0
        %v2887 = vadd.f32 0.0, %v2886
        %v2888 = vpop.f32.mrb[0].mxu0
        %2889 = vmatprep.mubr.bf16.mxu0 0
        %2890 = vmatmul.mubr.bf16.gmra.mrb[0].mxu0 %v2732
        %v2891 = vpop.f32.mrb[0].mxu0
        %v2892 = vadd.f32 0.0, %v2891
        %v2893 = vpop.f32.mrb[0].mxu0
        %v2894 = vpop.f32.mrb[0].mxu0
        %v2895 = vadd.f32 0.0, %v2894
        %v2896 = vpop.f32.mrb[0].mxu0
        %2897 = vdwg.mxu0
        %v2898 = vadd.f32 %v2688, %v2772
        %v2899 = vadd.f32 %v2689, %v2775
        %v2900 = vadd.f32 %v2690, %v2780
        %v2901 = vadd.f32 %v2691, %v2783
        %v2902 = vadd.f32 %v2692, %v2788
        %v2903 = vadd.f32 %v2693, %v2791
        %v2904 = vadd.f32 %v2694, %v2796
        %v2905 = vadd.f32 %v2695, %v2799
        %v2906 = vadd.f32 %v2696, %v2804
        %v2907 = vadd.f32 %v2697, %v2807
        %v2908 = vadd.f32 %v2698, %v2812
        %v2909 = vadd.f32 %v2699, %v2815
        %v2910 = vadd.f32 %v2700, %v2820
        %v2911 = vadd.f32 %v2701, %v2823
        %v2912 = vadd.f32 %v2702, %v2828
        %v2913 = vadd.f32 %v2703, %v2831
        %v2914 = vadd.f32 %v2704, %v2836
        %v2915 = vadd.f32 %v2705, %v2839
        %v2916 = vadd.f32 %v2706, %v2844
        %v2917 = vadd.f32 %v2707, %v2847
        %v2918 = vadd.f32 %v2708, %v2852
        %v2919 = vadd.f32 %v2709, %v2855
        %v2920 = vadd.f32 %v2710, %v2860
        %v2921 = vadd.f32 %v2711, %v2863
        %v2922 = vadd.f32 %v2712, %v2868
        %v2923 = vadd.f32 %v2713, %v2871
        %v2924 = vadd.f32 %v2714, %v2876
        %v2925 = vadd.f32 %v2715, %v2879
        %v2926 = vadd.f32 %v2716, %v2884
        %v2927 = vadd.f32 %v2717, %v2887
        %v2928 = vadd.f32 %v2718, %v2892
        %v2929 = vadd.f32 %v2719, %v2895
        %v2930 = vld [vmem:[%s2] sm:$0x1]
        %v2932 = vlaneseq
        %v2933 = vshrl.u32 %v2932, 7
        %v2934 = vsub.s32 0, %v2933
        %v2935 = vrot.slane %v2930, %v2934
        %v2937 = vadd.f32 %v2898, %v2935
        %v2938 = vadd.f32 %v2899, %v2935
        %v2939 = vadd.f32 %v2900, %v2935
        %v2940 = vadd.f32 %v2901, %v2935
        %v2941 = vadd.f32 %v2902, %v2935
        %v2942 = vadd.f32 %v2903, %v2935
        %v2943 = vadd.f32 %v2904, %v2935
        %v2944 = vadd.f32 %v2905, %v2935
        %v2945 = vadd.f32 %v2906, %v2935
        %v2946 = vadd.f32 %v2907, %v2935
        %v2947 = vadd.f32 %v2908, %v2935
        %v2948 = vadd.f32 %v2909, %v2935
        %v2949 = vadd.f32 %v2910, %v2935
        %v2950 = vadd.f32 %v2911, %v2935
        %v2951 = vadd.f32 %v2912, %v2935
        %v2952 = vadd.f32 %v2913, %v2935
        %v2953 = vadd.f32 %v2914, %v2935
        %v2954 = vadd.f32 %v2915, %v2935
        %v2955 = vadd.f32 %v2916, %v2935
        %v2956 = vadd.f32 %v2917, %v2935
        %v2957 = vadd.f32 %v2918, %v2935
        %v2958 = vadd.f32 %v2919, %v2935
        %v2959 = vadd.f32 %v2920, %v2935
        %v2960 = vadd.f32 %v2921, %v2935
        %v2961 = vadd.f32 %v2922, %v2935
        %v2962 = vadd.f32 %v2923, %v2935
        %v2963 = vadd.f32 %v2924, %v2935
        %v2964 = vadd.f32 %v2925, %v2935
        %v2965 = vadd.f32 %v2926, %v2935
        %v2966 = vadd.f32 %v2927, %v2935
        %v2967 = vadd.f32 %v2928, %v2935
        %v2968 = vadd.f32 %v2929, %v2935
        %v2969 = vmax.f32 %v2937, 0.0
        %v2970 = vmax.f32 %v2938, 0.0
        %v2971 = vmax.f32 %v2939, 0.0
        %v2972 = vmax.f32 %v2940, 0.0
        %v2973 = vmax.f32 %v2941, 0.0
        %v2974 = vmax.f32 %v2942, 0.0
        %v2975 = vmax.f32 %v2943, 0.0
        %v2976 = vmax.f32 %v2944, 0.0
        %v2977 = vmax.f32 %v2945, 0.0
        %v2978 = vmax.f32 %v2946, 0.0
        %v2979 = vmax.f32 %v2947, 0.0
        %v2980 = vmax.f32 %v2948, 0.0
        %v2981 = vmax.f32 %v2949, 0.0
        %v2982 = vmax.f32 %v2950, 0.0
        %v2983 = vmax.f32 %v2951, 0.0
        %v2984 = vmax.f32 %v2952, 0.0
        %v2985 = vmax.f32 %v2953, 0.0
        %v2986 = vmax.f32 %v2954, 0.0
        %v2987 = vmax.f32 %v2955, 0.0
        %v2988 = vmax.f32 %v2956, 0.0
        %v2989 = vmax.f32 %v2957, 0.0
        %v2990 = vmax.f32 %v2958, 0.0
        %v2991 = vmax.f32 %v2959, 0.0
        %v2992 = vmax.f32 %v2960, 0.0
        %v2993 = vmax.f32 %v2961, 0.0
        %v2994 = vmax.f32 %v2962, 0.0
        %v2995 = vmax.f32 %v2963, 0.0
        %v2996 = vmax.f32 %v2964, 0.0
        %v2997 = vmax.f32 %v2965, 0.0
        %v2998 = vmax.f32 %v2966, 0.0
        %v2999 = vmax.f32 %v2967, 0.0
        %v3000 = vmax.f32 %v2968, 0.0
        %v3001 = vadd.f32 %v2969, %v2970
        %v3002 = vadd.f32 %v3001, %v2971
        %v3003 = vadd.f32 %v3002, %v2972
        %v3004 = vadd.f32 %v3003, %v2973
        %v3005 = vadd.f32 %v3004, %v2974
        %v3006 = vadd.f32 %v3005, %v2975
        %v3007 = vadd.f32 %v3006, %v2976
        %v3008 = vadd.f32 %v3007, %v2977
        %v3009 = vadd.f32 %v3008, %v2978
        %v3010 = vadd.f32 %v3009, %v2979
        %v3011 = vadd.f32 %v3010, %v2980
        %v3012 = vadd.f32 %v3011, %v2981
        %v3013 = vadd.f32 %v3012, %v2982
        %v3014 = vadd.f32 %v3013, %v2983
        %v3015 = vadd.f32 %v3014, %v2984
        %v3016 = vadd.f32 %v3015, %v2985
        %v3017 = vadd.f32 %v3016, %v2986
        %v3018 = vadd.f32 %v3017, %v2987
        %v3019 = vadd.f32 %v3018, %v2988
        %v3020 = vadd.f32 %v3019, %v2989
        %v3021 = vadd.f32 %v3020, %v2990
        %v3022 = vadd.f32 %v3021, %v2991
        %v3023 = vadd.f32 %v3022, %v2992
        %v3024 = vadd.f32 %v3023, %v2993
        %v3025 = vadd.f32 %v3024, %v2994
        %v3026 = vadd.f32 %v3025, %v2995
        %v3027 = vadd.f32 %v3026, %v2996
        %v3028 = vadd.f32 %v3027, %v2997
        %v3029 = vadd.f32 %v3028, %v2998
        %v3030 = vadd.f32 %v3029, %v2999
        %v3031 = vadd.f32 %v3030, %v3000
        %v3032 = vrot.slane %v3031, 4
        %v3033 = vadd.f32 %v3031, %v3032
        %v3034 = vrot.slane %v3033, 2
        %v3035 = vadd.f32 %v3033, %v3034
        %v3036 = vrot.slane %v3035, 1
        %v3037 = vadd.f32 %v3035, %v3036
        %v3038 = vmul.f32 %v3037, 0.00390625
        %v3039 = vld [vmem:[%s3] sm:$0xff]
        %v3040 = vld [vmem:[%s3 + $0x8] sm:$0xff]
        %v3041 = vld [vmem:[%s3 + $0x10] sm:$0xff]
        %v3042 = vld [vmem:[%s3 + $0x18] sm:$0xff]
        %v3043 = vld [vmem:[%s3 + $0x20] sm:$0xff]
        %v3044 = vld [vmem:[%s3 + $0x28] sm:$0xff]
        %v3045 = vld [vmem:[%s3 + $0x30] sm:$0xff]
        %v3046 = vld [vmem:[%s3 + $0x38] sm:$0xff]
        %v3047 = vld [vmem:[%s3 + $0x40] sm:$0xff]
        %v3048 = vld [vmem:[%s3 + $0x48] sm:$0xff]
        %v3049 = vld [vmem:[%s3 + $0x50] sm:$0xff]
        %v3050 = vld [vmem:[%s3 + $0x58] sm:$0xff]
        %v3051 = vld [vmem:[%s3 + $0x60] sm:$0xff]
        %v3052 = vld [vmem:[%s3 + $0x68] sm:$0xff]
        %v3053 = vld [vmem:[%s3 + $0x70] sm:$0xff]
        %v3054 = vld [vmem:[%s3 + $0x78] sm:$0xff]
        %v3055 = vld [vmem:[%s4] sm:$0x1]
        %3056 = vmatprep.subr.mxu0 0.0
        %3057 = vmatpush1.msra.mxu0 %v3039
        %3058 = vmatprep.subr.mxu0 0.0
        %3059 = vmatpush1.msra.mxu0 %v3040
        %3060 = vmatprep.subr.mxu0 0.0
        %3061 = vmatpush1.msra.mxu0 %v3041
        %3062 = vmatprep.subr.mxu0 0.0
        %3063 = vmatpush1.msra.mxu0 %v3042
        %3064 = vmatprep.subr.mxu0 0.0
        %3065 = vmatpush1.msra.mxu0 %v3043
        %3066 = vmatprep.subr.mxu0 0.0
        %3067 = vmatpush1.msra.mxu0 %v3044
        %3068 = vmatprep.subr.mxu0 0.0
        %3069 = vmatpush1.msra.mxu0 %v3045
        %3070 = vmatprep.subr.mxu0 0.0
        %3071 = vmatpush1.msra.mxu0 %v3046
        %3072 = vmatprep.subr.mxu0 0.0
        %3073 = vmatpush1.msra.mxu0 %v3047
        %3074 = vmatprep.subr.mxu0 0.0
        %3075 = vmatpush1.msra.mxu0 %v3048
        %3076 = vmatprep.subr.mxu0 0.0
        %3077 = vmatpush1.msra.mxu0 %v3049
        %3078 = vmatprep.subr.mxu0 0.0
        %3079 = vmatpush1.msra.mxu0 %v3050
        %3080 = vmatprep.subr.mxu0 0.0
        %3081 = vmatpush1.msra.mxu0 %v3051
        %3082 = vmatprep.subr.mxu0 0.0
        %3083 = vmatpush1.msra.mxu0 %v3052
        %3084 = vmatprep.subr.mxu0 0.0
        %3085 = vmatpush1.msra.mxu0 %v3053
        %3086 = vmatprep.subr.mxu0 0.0
        %3087 = vmatpush1.msra.mxu0 %v3054
        %3088 = vmatprep.subr.mxu0 0.0
        %3089 = vmatpush1.msra.mxu0 0.0
        %3090 = vmatprep.subr.mxu0 0.0
        %3091 = vmatpush1.msra.mxu0 0.0
        %3092 = vmatprep.subr.mxu0 0.0
        %3093 = vmatpush1.msra.mxu0 0.0
        %3094 = vmatprep.subr.mxu0 0.0
        %3095 = vmatpush1.msra.mxu0 0.0
        %3096 = vmatprep.subr.mxu0 0.0
        %3097 = vmatpush1.msra.mxu0 0.0
        %3098 = vmatprep.subr.mxu0 0.0
        %3099 = vmatpush1.msra.mxu0 0.0
        %3100 = vmatprep.subr.mxu0 0.0
        %3101 = vmatpush1.msra.mxu0 0.0
        %3102 = vmatprep.subr.mxu0 0.0
        %3103 = vmatpush1.msra.mxu0 0.0
        %3104 = vmatprep.subr.mxu0 0.0
        %3105 = vmatpush1.msra.mxu0 0.0
        %3106 = vmatprep.subr.mxu0 0.0
        %3107 = vmatpush1.msra.mxu0 0.0
        %3108 = vmatprep.subr.mxu0 0.0
        %3109 = vmatpush1.msra.mxu0 0.0
        %3110 = vmatprep.subr.mxu0 0.0
        %3111 = vmatpush1.msra.mxu0 0.0
        %3112 = vmatprep.subr.mxu0 0.0
        %3113 = vmatpush1.msra.mxu0 0.0
        %3114 = vmatprep.subr.mxu0 0.0
        %3115 = vmatpush1.msra.mxu0 0.0
        %3116 = vmatprep.subr.mxu0 0.0
        %3117 = vmatpush1.msra.mxu0 0.0
        %3118 = vmatprep.subr.mxu0 0.0
        %3119 = vmatpush1.msra.mxu0 0.0
        %3120 = vmatprep.mubr.f32.mxu0 0.0
        %3121 = vmatmul.mubr.f32.gmra.mrb[0].mxu0 %v3038
        %v3122 = vpop.f32.mrb[0].mxu0
        %v3123 = vadd.f32 %v3055, %v3122
        %v3124 = vpop.f32.mrb[0].mxu0
        %3125 = vdwg.mxu0
        %3126 = vst [vmem:[%s216] sm:$0x1] %v3123
        %s3127 = sand.u32 %s137, 1
        %s3128 = scalar_lea.sflag [#allocation3], %s3127
        %s3129 = sand.u32 %s137, 1
        %s3130 = scalar_lea.vmem [#allocation2], %s3129
        // Predicated region
        $region41: #{total_net_forward.1} parent=39 // pred_check
          %p3131 = pneg %p147
        $region42: #{total_net_forward.1} parent=39 // pred_check_branch
          %3133 = sbr.rel (%p3131) target = $region44
        $region43: #{total_net_forward.1} parent=39 // pred_region
          %s3135 = ssub.s32 16, 16
          %3136 = vsyncadd %s3128, %s3135
          %s3137 = smul.addr %s19, 16
          %s3138 = scalar_lea.hbm %s5, %s3137
          %s3140 = sshll.u32 %s3130, 4
          %s3141 = int_to_ptr.vmem [resolvable:$true] %s3140
          %3143 = dma.vmem_to_hbm [thread:$0]  %s3141, 16, %s3138, %s3128
        $region44: #{total_net_forward.1} parent=39 // pred_fallthru
          _
      $region40: #{total_net_forward.1} parent=5 // pred_fallthru
        _
      %p3144 = scmp.le.s32.totalorder 2, %s14
      // Predicated region
      $region45: #{total_net_forward.1} parent=5 // pred_check
        %p3145 = pneg %p3144
      $region46: #{total_net_forward.1} parent=5 // pred_check_branch
        %3147 = sbr.rel (%p3145) target = $region48
      $region47: #{total_net_forward.1} parent=5 // pred_region
        %s3148 = ssub.s32 %s14, 2
        // Predicated region
        $region49: #{total_net_forward.1} parent=47 // pred_check
          %p3149 = pneg %p153
        $region50: #{total_net_forward.1} parent=47 // pred_check_branch
          %3151 = sbr.rel (%p3149) target = $region52
        $region51: #{total_net_forward.1} parent=47 // pred_region
          %s3152 = sand.u32 %s138, 1
          %s3153 = scalar_lea.sflag [#allocation3], %s3152
          %s3154 = sand.u32 %s138, 1
          %s3155 = scalar_lea.vmem [#allocation2], %s3154
          %3156 = dma.done %s3153, 16
        $region52: #{total_net_forward.1} parent=47 // pred_fallthru
          _
      $region48: #{total_net_forward.1} parent=5 // pred_fallthru
        _
    $region6: #{total_net_forward.1} parent=1 // loop_footer
      %s18 = sadd.s32 1, %s14
    $region7: #{total_net_forward.1} parent=1 // loop_footer_branch
      %13 = sbr.rel target = $region3
    $region8: #{total_net_forward.1} parent=1 // loop_exit
      _
    %3157 = vsyncpa [#allocation3], 1
    %s3158 = scalar_lea.sflag [#allocation3], 1
    %3159 = vsyncpa %s3158, 1

</llo_original>
